<compile_context>
chip_gen: v5e
topology: v5e:2x2
jax: 0.10.0
libtpu: 0.0.40
codegen_flags: <defaults>
</compile_context>

<pallas_src>
import functools
import math

import jax
import jax.numpy as jnp
from jax.experimental import pallas as pl
from jax.experimental.pallas import tpu as pltpu


# ----------------------------------------------------------------------------
# helpers
# ----------------------------------------------------------------------------
def _round_up(x, m):
    return ((x + m - 1) // m) * m


def _vmem_cap_bytes():
    """Generation-aware VMEM ceiling (leave headroom for compiler scratch)."""
    cap = 128 << 20
    try:
        info = pltpu.get_tpu_info()
        for name in ("vmem_capacity_bytes", "vmem_size_bytes", "vmem_bytes"):
            v = getattr(info, name, None)
            if v:
                cap = int(v)
                break
    except Exception:
        pass
    # ~12.5% (>= 8 MiB) headroom: 64 MiB (v7x) -> 56 MiB, 128 MiB -> 112 MiB.
    return max(cap - max(cap // 8, 8 << 20), 16 << 20)


def _compiler_params(vmem_bytes, semantics):
    limit = int(min(max(int(vmem_bytes), 32 << 20), _vmem_cap_bytes()))
    return pltpu.CompilerParams(dimension_semantics=semantics,
                                vmem_limit_bytes=limit)


# ----------------------------------------------------------------------------
# Fused MultiHeadAttention + AddNorm kernel.
#   out = LayerNorm(xq + MHA(xq, kv, kv, valid_lens))      (dropout = identity)
# One (batch, q-tile) grid step; kv / weights resident across q-tiles.
# ----------------------------------------------------------------------------
def _mha_addnorm_kernel(xq_ref, kv_ref, vl_ref, wq_ref, wk_ref, wv_ref, wo_ref,
                        g_ref, b_ref, o_ref, *, num_heads, scale, eps):
    # xq_ref: (1, tq, D)   kv_ref: (1, Skv, D)   vl_ref: (1, tq, 1) int32
    # w*_ref: (D, D)       g/b_ref: (1, D)       o_ref: (1, tq, D)
    xq = xq_ref[0]                                # (tq, D), native dtype
    xkv = kv_ref[0]                               # (Skv, D)
    tq, d = xq.shape
    skv = xkv.shape[0]
    dh = d // num_heads
    cdt = xq.dtype                                # compute dtype for MXU operands

    # Fused full-width projections (N = D fills the MXU), f32 accumulation.
    q = jnp.dot(xq, wq_ref[...], preferred_element_type=jnp.float32).astype(cdt)
    k = jnp.dot(xkv, wk_ref[...], preferred_element_type=jnp.float32).astype(cdt)
    v = jnp.dot(xkv, wv_ref[...], preferred_element_type=jnp.float32).astype(cdt)

    # keep[qpos, kpos] = kpos < valid_len[qpos]   (built in-kernel, no HBM mask)
    vl = vl_ref[0]                                            # (tq, 1) int32
    kidx = jax.lax.broadcasted_iota(jnp.int32, (tq, skv), 1)
    keep = kidx < vl                                          # (tq, skv) bool

    # Per-head scores / masked softmax / PV (only this step stays per head).
    ctx_heads = []
    for h in range(num_heads):
        qh = q[:, h * dh:(h + 1) * dh]
        kh = k[:, h * dh:(h + 1) * dh]
        vh = v[:, h * dh:(h + 1) * dh]
        s = jax.lax.dot_general(qh, kh, (((1,), (1,)), ((), ())),
                                preferred_element_type=jnp.float32) * scale
        s = jnp.where(keep, s, -1e6)              # PyTorch masked_softmax fill
        s = s - jnp.max(s, axis=-1, keepdims=True)
        e = jnp.exp(s)
        denom = jnp.sum(e, axis=-1, keepdims=True)
        inv = pl.reciprocal(denom, approx=True)   # EUP slot
        inv = inv * (2.0 - denom * inv)           # one Newton step -> f32 accurate
        p = (e * inv).astype(cdt)
        ctx_heads.append(jnp.dot(p, vh, preferred_element_type=jnp.float32))
    ctx = jnp.concatenate(ctx_heads, axis=-1).astype(cdt)     # (tq, D)

    attn = jnp.dot(ctx, wo_ref[...], preferred_element_type=jnp.float32)

    # Fused AddNorm epilogue (dropout = identity for p=0 / eval).
    s_full = xq.astype(jnp.float32) + attn
    mu = jnp.mean(s_full, axis=-1, keepdims=True)
    c = s_full - mu
    var = jnp.mean(c * c, axis=-1, keepdims=True)
    y = c * jax.lax.rsqrt(var + eps)
    o_ref[0] = (y * g_ref[...].astype(jnp.float32)
                + b_ref[...].astype(jnp.float32)).astype(o_ref.dtype)


def mha_add_norm(xq, kv, valid_lens, wq, wk, wv, wo, gamma, beta, num_heads,
                 *, eps=1e-5, tile_q=256):
    """LayerNorm(xq + MultiHeadAttention(xq, kv, kv, valid_lens)).

    xq: (B,Sq,D)   kv: (B,Skv,D)   weights stored as (in,out), no bias.
    valid_lens: None | (B,) | (B,Sq) key-lengths (masked_softmax semantics).
    """
    B, Sq, D = xq.shape
    Skv = kv.shape[1]
    assert D % num_heads == 0
    dh = D // num_heads

    # Tiny per-row valid-lens array; the (Sq,Skv) mask is regenerated in-kernel.
    if valid_lens is None:
        vl = jnp.full((B, Sq), Skv, dtype=jnp.int32)
    else:
        vl = jnp.asarray(valid_lens).astype(jnp.int32)
        if vl.ndim == 1:
            vl = jnp.broadcast_to(vl[:, None], (B, Sq))
    vl = vl.reshape(B, Sq, 1)

    tq = min(tile_q, Sq)
    Sqp = _round_up(Sq, tq)
    xq_p, vl_p = xq, vl
    if Sqp != Sq:                                 # rare ragged case (not in test)
        xq_p = jnp.pad(xq, ((0, 0), (0, Sqp - Sq), (0, 0)))
        vl_p = jnp.pad(vl, ((0, 0), (0, Sqp - Sq), (0, 0)))  # len 0 -> fully masked
    n_q = Sqp // tq

    x_item = jnp.dtype(xq.dtype).itemsize
    w_item = jnp.dtype(wq.dtype).itemsize
    vmem = (2 * (tq * D + Skv * D + tq * D) * x_item          # xq / kv / out buffers
            + 2 * tq * 4                                       # valid-lens block
            + 2 * 4 * D * D * w_item + 4 * D * 4               # weights + gamma/beta
            + 4 * (3 * tq * D + 2 * Skv * D + 3 * tq * Skv)    # f32 intermediates
            + (8 << 20))

    kernel = functools.partial(_mha_addnorm_kernel, num_heads=num_heads,
                               scale=1.0 / math.sqrt(dh), eps=eps)
    out = pl.pallas_call(
        kernel,
        out_shape=jax.ShapeDtypeStruct((B, Sqp, D), xq.dtype),
        grid_spec=pltpu.PrefetchScalarGridSpec(
            num_scalar_prefetch=0,
            grid=(B, n_q),
            in_specs=[
                pl.BlockSpec((1, tq, D), lambda b, qi: (b, qi, 0)),    # queries / skip
                pl.BlockSpec((1, Skv, D), lambda b, qi: (b, 0, 0)),    # keys/values
                pl.BlockSpec((1, tq, 1), lambda b, qi: (b, qi, 0)),    # valid lens
                pl.BlockSpec((D, D), lambda b, qi: (0, 0)),            # Wq (resident)
                pl.BlockSpec((D, D), lambda b, qi: (0, 0)),            # Wk (resident)
                pl.BlockSpec((D, D), lambda b, qi: (0, 0)),            # Wv (resident)
                pl.BlockSpec((D, D), lambda b, qi: (0, 0)),            # Wo (resident)
                pl.BlockSpec((1, D), lambda b, qi: (0, 0)),            # gamma
                pl.BlockSpec((1, D), lambda b, qi: (0, 0)),            # beta
            ],
            out_specs=pl.BlockSpec((1, tq, D), lambda b, qi: (b, qi, 0)),
        ),
        compiler_params=_compiler_params(vmem, ("parallel", "parallel")),
    )(xq_p, kv, vl_p, wq, wk, wv, wo, gamma.reshape(1, D), beta.reshape(1, D))
    return out[:, :Sq] if Sqp != Sq else out


# ----------------------------------------------------------------------------
# Fused PositionWiseFFN + AddNorm kernel.
#   out = LayerNorm(x + relu(x @ W1 + b1) @ W2 + b2)        (dropout = identity)
# Row-tiled; weights resident (constant block index -> fetched once).
# ----------------------------------------------------------------------------
def _ffn_addnorm_kernel(x_ref, w1_ref, b1_ref, w2_ref, b2_ref, g_ref, bn_ref,
                        o_ref, *, eps):
    x = x_ref[...]                                             # (tile_m, d) native dtype
    h = jnp.dot(x, w1_ref[...], preferred_element_type=jnp.float32) \
        + b1_ref[...].astype(jnp.float32)
    h = jnp.maximum(h, 0.0)
    # Cast hidden to the weight dtype so the second dot runs at native MXU rate
    # (no-op for f32 weights; one extra rounding for bf16).
    f = jnp.dot(h.astype(w2_ref.dtype), w2_ref[...],
                preferred_element_type=jnp.float32) \
        + b2_ref[...].astype(jnp.float32)

    s = x.astype(jnp.float32) + f                              # fused AddNorm
    mu = jnp.mean(s, axis=-1, keepdims=True)
    c = s - mu
    var = jnp.mean(c * c, axis=-1, keepdims=True)
    y = c * jax.lax.rsqrt(var + eps)
    o_ref[...] = (y * g_ref[...].astype(jnp.float32)
                  + bn_ref[...].astype(jnp.float32)).astype(o_ref.dtype)


def ffn_add_norm(x, w1, b1, w2, b2, gamma, beta, *, eps=1e-5, tile_m=512):
    """x: (B,S,d) -> LayerNorm(x + FFN(x)); w1:(d,d_hid) w2:(d_hid,d)."""
    B, S, d_in = x.shape
    d_hid = w1.shape[1]
    d_out = w2.shape[1]
    assert d_out == d_in, "AddNorm fusion requires ffn output dim == input dim"
    M = B * S
    tile_m = min(tile_m, _round_up(M, 8))
    Mp = _round_up(M, tile_m)
    x2 = x.reshape(M, d_in)
    if Mp != M:
        # TODO(synk): replace with a masked store of the last partial tile.
        x2 = jnp.pad(x2, ((0, Mp - M), (0, 0)))

    x_item = jnp.dtype(x.dtype).itemsize
    w_item = jnp.dtype(w1.dtype).itemsize
    vmem = (2 * tile_m * (d_in + d_out) * x_item                    # streamed rows
            + 2 * (d_in * d_hid + d_hid + d_hid * d_out + 3 * d_out) * w_item
            + 4 * tile_m * (d_hid + 2 * d_in)                       # f32 intermediates
            + (8 << 20))

    out = pl.pallas_call(
        functools.partial(_ffn_addnorm_kernel, eps=eps),
        out_shape=jax.ShapeDtypeStruct((Mp, d_out), x.dtype),
        grid_spec=pltpu.PrefetchScalarGridSpec(
            num_scalar_prefetch=0,
            grid=(Mp // tile_m,),
            in_specs=[
                pl.BlockSpec((tile_m, d_in), lambda i: (i, 0)),   # streamed X / skip
                pl.BlockSpec((d_in, d_hid), lambda i: (0, 0)),    # W1 (resident)
                pl.BlockSpec((1, d_hid), lambda i: (0, 0)),       # b1
                pl.BlockSpec((d_hid, d_out), lambda i: (0, 0)),   # W2 (resident)
                pl.BlockSpec((1, d_out), lambda i: (0, 0)),       # b2
                pl.BlockSpec((1, d_out), lambda i: (0, 0)),       # gamma
                pl.BlockSpec((1, d_out), lambda i: (0, 0)),       # beta
            ],
            out_specs=pl.BlockSpec((tile_m, d_out), lambda i: (i, 0)),
        ),
        compiler_params=_compiler_params(vmem, ("parallel",)),
    )(x2, w1, b1.reshape(1, d_hid), w2, b2.reshape(1, d_out),
      gamma.reshape(1, d_out), beta.reshape(1, d_out))
    return out[:M].reshape(B, S, d_out)


# ----------------------------------------------------------------------------
# DecoderBlock forward (Pallas path).
# ----------------------------------------------------------------------------
def decoder_block_forward(X, state, params, *, num_heads, block_index=0,
                          training=True):
    """state = (enc_outputs, enc_valid_lens, [cached_kv per layer])."""
    enc_outputs, enc_valid_lens, caches = state
    cached = caches[block_index]
    key_values = X if cached is None else jnp.concatenate([cached, X], axis=1)
    caches = list(caches)
    caches[block_index] = key_values

    B, S, _ = X.shape
    if training:
        dec_valid_lens = jnp.broadcast_to(
            jnp.arange(1, S + 1, dtype=jnp.int32)[None, :], (B, S))
    else:
        dec_valid_lens = None

    p = params
    # TODO(synk): dropout is identity (p=0 / eval); no in-kernel dropout RNG.
    Y = mha_add_norm(X, key_values, dec_valid_lens,
                     p["wq1"], p["wk1"], p["wv1"], p["wo1"],
                     p["g1"], p["bn1"], num_heads)
    Z = mha_add_norm(Y, enc_outputs, enc_valid_lens,
                     p["wq2"], p["wk2"], p["wv2"], p["wo2"],
                     p["g2"], p["bn2"], num_heads)
    out = ffn_add_norm(Z, p["w1"], p["b1"], p["w2"], p["b2"], p["g3"], p["bn3"])
    return out, (enc_outputs, enc_valid_lens, caches)


# ----------------------------------------------------------------------------
# Pure-JAX reference (same math as the PyTorch module, dropout=identity).
# ----------------------------------------------------------------------------
def _ref_keep_mask(valid_lens, batch, sq, skv):
    if valid_lens is None:
        return jnp.ones((batch, sq, skv), bool)
    vl = jnp.asarray(valid_lens)
    if vl.ndim == 1:
        vl = jnp.broadcast_to(vl[:, None], (batch, sq))
    kidx = jnp.arange(skv, dtype=vl.dtype)[None, None, :]
    return kidx < vl[:, :, None]


def _ref_mha(xq, kv, valid_lens, wq, wk, wv, wo, num_heads):
    B, Sq, D = xq.shape
    Skv = kv.shape[1]
    dh = D // num_heads
    q = (xq @ wq).reshape(B, Sq, num_heads, dh).transpose(0, 2, 1, 3)
    k = (kv @ wk).reshape(B, Skv, num_heads, dh).transpose(0, 2, 1, 3)
    v = (kv @ wv).reshape(B, Skv, num_heads, dh).transpose(0, 2, 1, 3)
    s = jnp.einsum("bhqd,bhkd->bhqk", q, k) / math.sqrt(dh)
    keep = _ref_keep_mask(valid_lens, B, Sq, Skv)
    s = jnp.where(keep[:, None, :, :], s, -1e6)
    p = jax.nn.softmax(s, axis=-1)
    o = jnp.einsum("bhqk,bhkd->bhqd", p, v)
    o = o.transpose(0, 2, 1, 3).reshape(B, Sq, D)
    return o @ wo


def _ref_add_norm(x, y, gamma, beta, eps=1e-5):
    s = x + y
    mu = s.mean(-1, keepdims=True)
    var = ((s - mu) ** 2).mean(-1, keepdims=True)
    return (s - mu) / jnp.sqrt(var + eps) * gamma + beta


def _ref_ffn(x, w1, b1, w2, b2):
    return jnp.maximum(x @ w1 + b1, 0.0) @ w2 + b2


def _ref_decoder_block(X, key_values, dec_valid_lens, enc_outputs,
                       enc_valid_lens, p, num_heads):
    X2 = _ref_mha(X, key_values, dec_valid_lens,
                  p["wq1"], p["wk1"], p["wv1"], p["wo1"], num_heads)
    Y = _ref_add_norm(X, X2, p["g1"], p["bn1"])
    Y2 = _ref_mha(Y, enc_outputs, enc_valid_lens,
                  p["wq2"], p["wk2"], p["wv2"], p["wo2"], num_heads)
    Z = _ref_add_norm(Y, Y2, p["g2"], p["bn2"])
    F = _ref_ffn(Z, p["w1"], p["b1"], p["w2"], p["b2"])
    return _ref_add_norm(Z, F, p["g3"], p["bn3"])


# ----------------------------------------------------------------------------
if __name__ == "__main__":
    # DecoderBlock(key/query/value_size=32, num_hiddens=32, norm_shape=32,
    #              ffn_num_input=32, ffn_num_hiddens=64, num_heads=4, dropout=0)
    B, S, D = 2, 8, 32
    H = 4
    d_ffn = 64
    S_enc = 8

    key = jax.random.PRNGKey(0)
    ks = jax.random.split(key, 24)

    def nrm(k, shape, scale=1.0):
        return jax.random.normal(k, shape, dtype=jnp.float32) * scale

    X = nrm(ks[0], (B, S, D))
    enc_outputs = nrm(ks[1], (B, S_enc, D))
    enc_valid_lens = jnp.array([6, 8], dtype=jnp.int32)

    sw = 1.0 / math.sqrt(D)
    params = dict(
        # attention 1 (self) and 2 (cross): Linear weights stored as (in, out), no bias
        wq1=nrm(ks[2], (D, D), sw), wk1=nrm(ks[3], (D, D), sw),
        wv1=nrm(ks[4], (D, D), sw), wo1=nrm(ks[5], (D, D), sw),
        wq2=nrm(ks[6], (D, D), sw), wk2=nrm(ks[7], (D, D), sw),
        wv2=nrm(ks[8], (D, D), sw), wo2=nrm(ks[9], (D, D), sw),
        # LayerNorm affine params
        g1=1.0 + 0.1 * nrm(ks[10], (D,)), bn1=0.01 * nrm(ks[11], (D,)),
        g2=1.0 + 0.1 * nrm(ks[12], (D,)), bn2=0.01 * nrm(ks[13], (D,)),
        g3=1.0 + 0.1 * nrm(ks[14], (D,)), bn3=0.01 * nrm(ks[15], (D,)),
        # FFN
        w1=nrm(ks[16], (D, d_ffn), sw), b1=0.01 * nrm(ks[17], (d_ffn,)),
        w2=nrm(ks[18], (d_ffn, D), 1.0 / math.sqrt(d_ffn)),
        b2=0.01 * nrm(ks[19], (D,)),
    )

    # --- step 1: training-mode forward (causal dec_valid_lens, empty cache) ---
    state = (enc_outputs, enc_valid_lens, [None])
    out1, state = decoder_block_forward(X, state, params, num_heads=H,
                                        block_index=0, training=True)
    out1 = jax.block_until_ready(out1)

    dec_vl = jnp.broadcast_to(jnp.arange(1, S + 1, dtype=jnp.int32)[None, :], (B, S))
    ref1 = _ref_decoder_block(X, X, dec_vl, enc_outputs, enc_valid_lens, params, H)
    assert out1.shape == (B, S, D)
    assert jnp.allclose(out1, ref1, atol=5e-4, rtol=5e-4), \
        float(jnp.max(jnp.abs(out1 - ref1)))

    # --- step 2: inference-mode forward (uses the KV cache, no dec mask) ---
    X_step = nrm(ks[20], (B, 4, D))
    out2, state = decoder_block_forward(X_step, state, params, num_heads=H,
                                        block_index=0, training=False)
    out2 = jax.block_until_ready(out2)

    kv2 = jnp.concatenate([X, X_step], axis=1)
    ref2 = _ref_decoder_block(X_step, kv2, None, enc_outputs, enc_valid_lens,
                              params, H)
    assert out2.shape == (B, 4, D)
    assert jnp.allclose(out2, ref2, atol=5e-4, rtol=5e-4), \
        float(jnp.max(jnp.abs(out2 - ref2)))

    print("KERNEL_OK")
</pallas_src>

<mosaic_0001>
module attributes {stable_mosaic.version = 11 : i64} {
  func.func @_mha_addnorm_kernel(%arg0: i32, %arg1: i32, %arg2: memref<1x8x32xf32, #tpu.memory_space<vmem>>, %arg3: memref<1x8x32xf32, #tpu.memory_space<vmem>>, %arg4: memref<1x8x1xi32, #tpu.memory_space<vmem>>, %arg5: memref<32x32xf32, #tpu.memory_space<vmem>>, %arg6: memref<32x32xf32, #tpu.memory_space<vmem>>, %arg7: memref<32x32xf32, #tpu.memory_space<vmem>>, %arg8: memref<32x32xf32, #tpu.memory_space<vmem>>, %arg9: memref<1x32xf32, #tpu.memory_space<vmem>>, %arg10: memref<1x32xf32, #tpu.memory_space<vmem>>, %arg11: memref<1x8x32xf32, #tpu.memory_space<vmem>>) attributes {dimension_semantics = [#tpu.dimension_semantics<parallel>, #tpu.dimension_semantics<parallel>], iteration_bounds = array<i64: 2, 1>, scalar_prefetch = 0 : i64, scratch_operands = 0 : i64, tpu.core_type = #tpu.core_type<tc>, window_params = [{transform_indices = @transform_0, window_bounds = array<i64: 1, 8, 32>}, {transform_indices = @transform_1, window_bounds = array<i64: 1, 8, 32>}, {transform_indices = @transform_2, window_bounds = array<i64: 1, 8, 1>}, {pipeline_mode = #tpu.pipeline_mode<synchronous>, transform_indices = @transform_3, window_bounds = array<i64: 32, 32>}, {pipeline_mode = #tpu.pipeline_mode<synchronous>, transform_indices = @transform_4, window_bounds = array<i64: 32, 32>}, {pipeline_mode = #tpu.pipeline_mode<synchronous>, transform_indices = @transform_5, window_bounds = array<i64: 32, 32>}, {pipeline_mode = #tpu.pipeline_mode<synchronous>, transform_indices = @transform_6, window_bounds = array<i64: 32, 32>}, {pipeline_mode = #tpu.pipeline_mode<synchronous>, transform_indices = @transform_7, window_bounds = array<i64: 1, 32>}, {pipeline_mode = #tpu.pipeline_mode<synchronous>, transform_indices = @transform_8, window_bounds = array<i64: 1, 32>}, {transform_indices = @transform_9, window_bounds = array<i64: 1, 8, 32>}]} {
    %c0 = arith.constant 0 : index
    %c0_0 = arith.constant 0 : index
    %c0_1 = arith.constant 0 : index
    %0 = vector.load %arg2[%c0, %c0_0, %c0_1] : memref<1x8x32xf32, #tpu.memory_space<vmem>>, vector<1x8x32xf32>
    %1 = vector.shape_cast %0 : vector<1x8x32xf32> to vector<8x32xf32>
    %c0_2 = arith.constant 0 : index
    %c0_3 = arith.constant 0 : index
    %c0_4 = arith.constant 0 : index
    %2 = vector.load %arg3[%c0_2, %c0_3, %c0_4] : memref<1x8x32xf32, #tpu.memory_space<vmem>>, vector<1x8x32xf32>
    %3 = vector.shape_cast %2 : vector<1x8x32xf32> to vector<8x32xf32>
    %c0_5 = arith.constant 0 : index
    %c0_6 = arith.constant 0 : index
    %4 = vector.load %arg5[%c0_5, %c0_6] : memref<32x32xf32, #tpu.memory_space<vmem>>, vector<32x32xf32>
    %cst = arith.constant dense<0.000000e+00> : vector<8x32xf32>
    %5 = tpu.matmul %1, %4, %cst {dimension_numbers = #tpu.dot_dimension_numbers<[1], [0], [0], [1], [0, 0, 1, 1], [], []>} : vector<8x32xf32>, vector<32x32xf32>, vector<8x32xf32> -> vector<8x32xf32>
    %c0_7 = arith.constant 0 : index
    %c0_8 = arith.constant 0 : index
    %6 = vector.load %arg6[%c0_7, %c0_8] : memref<32x32xf32, #tpu.memory_space<vmem>>, vector<32x32xf32>
    %cst_9 = arith.constant dense<0.000000e+00> : vector<8x32xf32>
    %7 = tpu.matmul %3, %6, %cst_9 {dimension_numbers = #tpu.dot_dimension_numbers<[1], [0], [0], [1], [0, 0, 1, 1], [], []>} : vector<8x32xf32>, vector<32x32xf32>, vector<8x32xf32> -> vector<8x32xf32>
    %c0_10 = arith.constant 0 : index
    %c0_11 = arith.constant 0 : index
    %8 = vector.load %arg7[%c0_10, %c0_11] : memref<32x32xf32, #tpu.memory_space<vmem>>, vector<32x32xf32>
    %cst_12 = arith.constant dense<0.000000e+00> : vector<8x32xf32>
    %9 = tpu.matmul %3, %8, %cst_12 {dimension_numbers = #tpu.dot_dimension_numbers<[1], [0], [0], [1], [0, 0, 1, 1], [], []>} : vector<8x32xf32>, vector<32x32xf32>, vector<8x32xf32> -> vector<8x32xf32>
    %c0_13 = arith.constant 0 : index
    %c0_14 = arith.constant 0 : index
    %c0_15 = arith.constant 0 : index
    %10 = vector.load %arg4[%c0_13, %c0_14, %c0_15] : memref<1x8x1xi32, #tpu.memory_space<vmem>>, vector<1x8x1xi32>
    %11 = vector.shape_cast %10 : vector<1x8x1xi32> to vector<8x1xi32>
    %12 = tpu.iota {dimensions = array<i32: 1>} : vector<8x8xi32>
    %13 = vector.broadcast %11 : vector<8x1xi32> to vector<8x8xi32>
    %14 = arith.cmpi slt, %12, %13 : vector<8x8xi32>
    %15 = vector.extract_strided_slice %5 {offsets = [0, 0], sizes = [8, 8], strides = [1, 1]} : vector<8x32xf32> to vector<8x8xf32>
    %16 = vector.extract_strided_slice %7 {offsets = [0, 0], sizes = [8, 8], strides = [1, 1]} : vector<8x32xf32> to vector<8x8xf32>
    %17 = vector.extract_strided_slice %9 {offsets = [0, 0], sizes = [8, 8], strides = [1, 1]} : vector<8x32xf32> to vector<8x8xf32>
    %cst_16 = arith.constant dense<0.000000e+00> : vector<8x8xf32>
    %18 = tpu.matmul %15, %16, %cst_16 {dimension_numbers = #tpu.dot_dimension_numbers<[1], [1], [0], [0], [0, 0, 1, 0], [], []>} : vector<8x8xf32>, vector<8x8xf32>, vector<8x8xf32> -> vector<8x8xf32>
    %cst_17 = arith.constant 0.353553385 : f32
    %19 = vector.broadcast %cst_17 : f32 to vector<8x8xf32>
    %20 = arith.mulf %18, %19 : vector<8x8xf32>
    %cst_18 = arith.constant -1.000000e+06 : f32
    %21 = vector.broadcast %cst_18 : f32 to vector<8x8xf32>
    %22 = arith.select %14, %20, %21 : vector<8x8xi1>, vector<8x8xf32>
    %cst_19 = arith.constant dense<0xFF800000> : vector<8xf32>
    %23 = vector.multi_reduction <maximumf>, %22, %cst_19 [1] : vector<8x8xf32> to vector<8xf32>
    %24 = vector.shape_cast %23 : vector<8xf32> to vector<8x1xf32>
    %25 = vector.broadcast %24 : vector<8x1xf32> to vector<8x8xf32>
    %26 = arith.subf %22, %25 : vector<8x8xf32>
    %27 = math.exp %26 : vector<8x8xf32>
    %cst_20 = arith.constant dense<0.000000e+00> : vector<8xf32>
    %28 = vector.multi_reduction <add>, %27, %cst_20 [1] : vector<8x8xf32> to vector<8xf32>
    %29 = vector.shape_cast %28 : vector<8xf32> to vector<8x1xf32>
    %30 = tpu.reciprocal %29 {approx = true} : vector<8x1xf32> -> vector<8x1xf32>
    %31 = arith.mulf %29, %30 : vector<8x1xf32>
    %cst_21 = arith.constant 2.000000e+00 : f32
    %32 = vector.broadcast %cst_21 : f32 to vector<8x1xf32>
    %33 = arith.subf %32, %31 : vector<8x1xf32>
    %34 = arith.mulf %30, %33 : vector<8x1xf32>
    %35 = vector.broadcast %34 : vector<8x1xf32> to vector<8x8xf32>
    %36 = arith.mulf %27, %35 : vector<8x8xf32>
    %cst_22 = arith.constant dense<0.000000e+00> : vector<8x8xf32>
    %37 = tpu.matmul %36, %17, %cst_22 {dimension_numbers = #tpu.dot_dimension_numbers<[1], [0], [0], [1], [0, 0, 1, 1], [], []>} : vector<8x8xf32>, vector<8x8xf32>, vector<8x8xf32> -> vector<8x8xf32>
    %38 = vector.extract_strided_slice %5 {offsets = [0, 8], sizes = [8, 8], strides = [1, 1]} : vector<8x32xf32> to vector<8x8xf32>
    %39 = vector.extract_strided_slice %7 {offsets = [0, 8], sizes = [8, 8], strides = [1, 1]} : vector<8x32xf32> to vector<8x8xf32>
    %40 = vector.extract_strided_slice %9 {offsets = [0, 8], sizes = [8, 8], strides = [1, 1]} : vector<8x32xf32> to vector<8x8xf32>
    %cst_23 = arith.constant dense<0.000000e+00> : vector<8x8xf32>
    %41 = tpu.matmul %38, %39, %cst_23 {dimension_numbers = #tpu.dot_dimension_numbers<[1], [1], [0], [0], [0, 0, 1, 0], [], []>} : vector<8x8xf32>, vector<8x8xf32>, vector<8x8xf32> -> vector<8x8xf32>
    %cst_24 = arith.constant 0.353553385 : f32
    %42 = vector.broadcast %cst_24 : f32 to vector<8x8xf32>
    %43 = arith.mulf %41, %42 : vector<8x8xf32>
    %cst_25 = arith.constant -1.000000e+06 : f32
    %44 = vector.broadcast %cst_25 : f32 to vector<8x8xf32>
    %45 = arith.select %14, %43, %44 : vector<8x8xi1>, vector<8x8xf32>
    %cst_26 = arith.constant dense<0xFF800000> : vector<8xf32>
    %46 = vector.multi_reduction <maximumf>, %45, %cst_26 [1] : vector<8x8xf32> to vector<8xf32>
    %47 = vector.shape_cast %46 : vector<8xf32> to vector<8x1xf32>
    %48 = vector.broadcast %47 : vector<8x1xf32> to vector<8x8xf32>
    %49 = arith.subf %45, %48 : vector<8x8xf32>
    %50 = math.exp %49 : vector<8x8xf32>
    %cst_27 = arith.constant dense<0.000000e+00> : vector<8xf32>
    %51 = vector.multi_reduction <add>, %50, %cst_27 [1] : vector<8x8xf32> to vector<8xf32>
    %52 = vector.shape_cast %51 : vector<8xf32> to vector<8x1xf32>
    %53 = tpu.reciprocal %52 {approx = true} : vector<8x1xf32> -> vector<8x1xf32>
    %54 = arith.mulf %52, %53 : vector<8x1xf32>
    %cst_28 = arith.constant 2.000000e+00 : f32
    %55 = vector.broadcast %cst_28 : f32 to vector<8x1xf32>
    %56 = arith.subf %55, %54 : vector<8x1xf32>
    %57 = arith.mulf %53, %56 : vector<8x1xf32>
    %58 = vector.broadcast %57 : vector<8x1xf32> to vector<8x8xf32>
    %59 = arith.mulf %50, %58 : vector<8x8xf32>
    %cst_29 = arith.constant dense<0.000000e+00> : vector<8x8xf32>
    %60 = tpu.matmul %59, %40, %cst_29 {dimension_numbers = #tpu.dot_dimension_numbers<[1], [0], [0], [1], [0, 0, 1, 1], [], []>} : vector<8x8xf32>, vector<8x8xf32>, vector<8x8xf32> -> vector<8x8xf32>
    %61 = vector.extract_strided_slice %5 {offsets = [0, 16], sizes = [8, 8], strides = [1, 1]} : vector<8x32xf32> to vector<8x8xf32>
    %62 = vector.extract_strided_slice %7 {offsets = [0, 16], sizes = [8, 8], strides = [1, 1]} : vector<8x32xf32> to vector<8x8xf32>
    %63 = vector.extract_strided_slice %9 {offsets = [0, 16], sizes = [8, 8], strides = [1, 1]} : vector<8x32xf32> to vector<8x8xf32>
    %cst_30 = arith.constant dense<0.000000e+00> : vector<8x8xf32>
    %64 = tpu.matmul %61, %62, %cst_30 {dimension_numbers = #tpu.dot_dimension_numbers<[1], [1], [0], [0], [0, 0, 1, 0], [], []>} : vector<8x8xf32>, vector<8x8xf32>, vector<8x8xf32> -> vector<8x8xf32>
    %cst_31 = arith.constant 0.353553385 : f32
    %65 = vector.broadcast %cst_31 : f32 to vector<8x8xf32>
    %66 = arith.mulf %64, %65 : vector<8x8xf32>
    %cst_32 = arith.constant -1.000000e+06 : f32
    %67 = vector.broadcast %cst_32 : f32 to vector<8x8xf32>
    %68 = arith.select %14, %66, %67 : vector<8x8xi1>, vector<8x8xf32>
    %cst_33 = arith.constant dense<0xFF800000> : vector<8xf32>
    %69 = vector.multi_reduction <maximumf>, %68, %cst_33 [1] : vector<8x8xf32> to vector<8xf32>
    %70 = vector.shape_cast %69 : vector<8xf32> to vector<8x1xf32>
    %71 = vector.broadcast %70 : vector<8x1xf32> to vector<8x8xf32>
    %72 = arith.subf %68, %71 : vector<8x8xf32>
    %73 = math.exp %72 : vector<8x8xf32>
    %cst_34 = arith.constant dense<0.000000e+00> : vector<8xf32>
    %74 = vector.multi_reduction <add>, %73, %cst_34 [1] : vector<8x8xf32> to vector<8xf32>
    %75 = vector.shape_cast %74 : vector<8xf32> to vector<8x1xf32>
    %76 = tpu.reciprocal %75 {approx = true} : vector<8x1xf32> -> vector<8x1xf32>
    %77 = arith.mulf %75, %76 : vector<8x1xf32>
    %cst_35 = arith.constant 2.000000e+00 : f32
    %78 = vector.broadcast %cst_35 : f32 to vector<8x1xf32>
    %79 = arith.subf %78, %77 : vector<8x1xf32>
    %80 = arith.mulf %76, %79 : vector<8x1xf32>
    %81 = vector.broadcast %80 : vector<8x1xf32> to vector<8x8xf32>
    %82 = arith.mulf %73, %81 : vector<8x8xf32>
    %cst_36 = arith.constant dense<0.000000e+00> : vector<8x8xf32>
    %83 = tpu.matmul %82, %63, %cst_36 {dimension_numbers = #tpu.dot_dimension_numbers<[1], [0], [0], [1], [0, 0, 1, 1], [], []>} : vector<8x8xf32>, vector<8x8xf32>, vector<8x8xf32> -> vector<8x8xf32>
    %84 = vector.extract_strided_slice %5 {offsets = [0, 24], sizes = [8, 8], strides = [1, 1]} : vector<8x32xf32> to vector<8x8xf32>
    %85 = vector.extract_strided_slice %7 {offsets = [0, 24], sizes = [8, 8], strides = [1, 1]} : vector<8x32xf32> to vector<8x8xf32>
    %86 = vector.extract_strided_slice %9 {offsets = [0, 24], sizes = [8, 8], strides = [1, 1]} : vector<8x32xf32> to vector<8x8xf32>
    %cst_37 = arith.constant dense<0.000000e+00> : vector<8x8xf32>
    %87 = tpu.matmul %84, %85, %cst_37 {dimension_numbers = #tpu.dot_dimension_numbers<[1], [1], [0], [0], [0, 0, 1, 0], [], []>} : vector<8x8xf32>, vector<8x8xf32>, vector<8x8xf32> -> vector<8x8xf32>
    %cst_38 = arith.constant 0.353553385 : f32
    %88 = vector.broadcast %cst_38 : f32 to vector<8x8xf32>
    %89 = arith.mulf %87, %88 : vector<8x8xf32>
    %cst_39 = arith.constant -1.000000e+06 : f32
    %90 = vector.broadcast %cst_39 : f32 to vector<8x8xf32>
    %91 = arith.select %14, %89, %90 : vector<8x8xi1>, vector<8x8xf32>
    %cst_40 = arith.constant dense<0xFF800000> : vector<8xf32>
    %92 = vector.multi_reduction <maximumf>, %91, %cst_40 [1] : vector<8x8xf32> to vector<8xf32>
    %93 = vector.shape_cast %92 : vector<8xf32> to vector<8x1xf32>
    %94 = vector.broadcast %93 : vector<8x1xf32> to vector<8x8xf32>
    %95 = arith.subf %91, %94 : vector<8x8xf32>
    %96 = math.exp %95 : vector<8x8xf32>
    %cst_41 = arith.constant dense<0.000000e+00> : vector<8xf32>
    %97 = vector.multi_reduction <add>, %96, %cst_41 [1] : vector<8x8xf32> to vector<8xf32>
    %98 = vector.shape_cast %97 : vector<8xf32> to vector<8x1xf32>
    %99 = tpu.reciprocal %98 {approx = true} : vector<8x1xf32> -> vector<8x1xf32>
    %100 = arith.mulf %98, %99 : vector<8x1xf32>
    %cst_42 = arith.constant 2.000000e+00 : f32
    %101 = vector.broadcast %cst_42 : f32 to vector<8x1xf32>
    %102 = arith.subf %101, %100 : vector<8x1xf32>
    %103 = arith.mulf %99, %102 : vector<8x1xf32>
    %104 = vector.broadcast %103 : vector<8x1xf32> to vector<8x8xf32>
    %105 = arith.mulf %96, %104 : vector<8x8xf32>
    %cst_43 = arith.constant dense<0.000000e+00> : vector<8x8xf32>
    %106 = tpu.matmul %105, %86, %cst_43 {dimension_numbers = #tpu.dot_dimension_numbers<[1], [0], [0], [1], [0, 0, 1, 1], [], []>} : vector<8x8xf32>, vector<8x8xf32>, vector<8x8xf32> -> vector<8x8xf32>
    %107 = tpu.concatenate %37, %60, %83, %106 in 1 : vector<8x8xf32>, vector<8x8xf32>, vector<8x8xf32>, vector<8x8xf32> -> vector<8x32xf32>
    %c0_44 = arith.constant 0 : index
    %c0_45 = arith.constant 0 : index
    %108 = vector.load %arg8[%c0_44, %c0_45] : memref<32x32xf32, #tpu.memory_space<vmem>>, vector<32x32xf32>
    %cst_46 = arith.constant dense<0.000000e+00> : vector<8x32xf32>
    %109 = tpu.matmul %107, %108, %cst_46 {dimension_numbers = #tpu.dot_dimension_numbers<[1], [0], [0], [1], [0, 0, 1, 1], [], []>} : vector<8x32xf32>, vector<32x32xf32>, vector<8x32xf32> -> vector<8x32xf32>
    %110 = arith.addf %1, %109 : vector<8x32xf32>
    %cst_47 = arith.constant dense<0.000000e+00> : vector<8xf32>
    %111 = vector.multi_reduction <add>, %110, %cst_47 [1] : vector<8x32xf32> to vector<8xf32>
    %112 = vector.shape_cast %111 : vector<8xf32> to vector<8x1xf32>
    %cst_48 = arith.constant 3.200000e+01 : f32
    %113 = vector.broadcast %cst_48 : f32 to vector<8x1xf32>
    %114 = arith.divf %112, %113 : vector<8x1xf32>
    %115 = vector.broadcast %114 : vector<8x1xf32> to vector<8x32xf32>
    %116 = arith.subf %110, %115 : vector<8x32xf32>
    %117 = arith.mulf %116, %116 : vector<8x32xf32>
    %cst_49 = arith.constant dense<0.000000e+00> : vector<8xf32>
    %118 = vector.multi_reduction <add>, %117, %cst_49 [1] : vector<8x32xf32> to vector<8xf32>
    %119 = vector.shape_cast %118 : vector<8xf32> to vector<8x1xf32>
    %cst_50 = arith.constant 3.200000e+01 : f32
    %120 = vector.broadcast %cst_50 : f32 to vector<8x1xf32>
    %121 = arith.divf %119, %120 : vector<8x1xf32>
    %cst_51 = arith.constant 9.99999974E-6 : f32
    %122 = vector.broadcast %cst_51 : f32 to vector<8x1xf32>
    %123 = arith.addf %121, %122 : vector<8x1xf32>
    %124 = math.rsqrt %123 : vector<8x1xf32>
    %125 = vector.broadcast %124 : vector<8x1xf32> to vector<8x32xf32>
    %126 = arith.mulf %116, %125 : vector<8x32xf32>
    %c0_52 = arith.constant 0 : index
    %c0_53 = arith.constant 0 : index
    %127 = vector.load %arg9[%c0_52, %c0_53] : memref<1x32xf32, #tpu.memory_space<vmem>>, vector<1x32xf32>
    %128 = vector.broadcast %127 : vector<1x32xf32> to vector<8x32xf32>
    %129 = arith.mulf %126, %128 : vector<8x32xf32>
    %c0_54 = arith.constant 0 : index
    %c0_55 = arith.constant 0 : index
    %130 = vector.load %arg10[%c0_54, %c0_55] : memref<1x32xf32, #tpu.memory_space<vmem>>, vector<1x32xf32>
    %131 = vector.broadcast %130 : vector<1x32xf32> to vector<8x32xf32>
    %132 = arith.addf %129, %131 : vector<8x32xf32>
    %c0_56 = arith.constant 0 : index
    %c0_57 = arith.constant 0 : index
    %c0_58 = arith.constant 0 : index
    %133 = vector.load %arg11[%c0_56, %c0_57, %c0_58] : memref<1x8x32xf32, #tpu.memory_space<vmem>>, vector<1x8x32xf32>
    %134 = vector.shape_cast %133 : vector<1x8x32xf32> to vector<8x32xf32>
    %135 = vector.shape_cast %132 : vector<8x32xf32> to vector<1x8x32xf32>
    tpu.vector_store %arg11[%c0_56, %c0_57, %c0_58], %135 {strides = array<i32>} : memref<1x8x32xf32, #tpu.memory_space<vmem>>, vector<1x8x32xf32>,
    return
  }
  func.func @transform_0(%arg0: i32, %arg1: i32) -> (i32, i32, i32) {
    %c0_i32 = arith.constant 0 : i32
    %c0_i32_0 = arith.constant 0 : i32
    return %arg0, %arg1, %c0_i32 : i32, i32, i32
  }
  func.func @transform_1(%arg0: i32, %arg1: i32) -> (i32, i32, i32) {
    %c0_i32 = arith.constant 0 : i32
    %c0_i32_0 = arith.constant 0 : i32
    %c0_i32_1 = arith.constant 0 : i32
    return %arg0, %c0_i32, %c0_i32_0 : i32, i32, i32
  }
  func.func @transform_2(%arg0: i32, %arg1: i32) -> (i32, i32, i32) {
    %c0_i32 = arith.constant 0 : i32
    %c0_i32_0 = arith.constant 0 : i32
    return %arg0, %arg1, %c0_i32 : i32, i32, i32
  }
  func.func @transform_3(%arg0: i32, %arg1: i32) -> (i32, i32) {
    %c0_i32 = arith.constant 0 : i32
    %c0_i32_0 = arith.constant 0 : i32
    %c0_i32_1 = arith.constant 0 : i32
    return %c0_i32, %c0_i32_0 : i32, i32
  }
  func.func @transform_4(%arg0: i32, %arg1: i32) -> (i32, i32) {
    %c0_i32 = arith.constant 0 : i32
    %c0_i32_0 = arith.constant 0 : i32
    %c0_i32_1 = arith.constant 0 : i32
    return %c0_i32, %c0_i32_0 : i32, i32
  }
  func.func @transform_5(%arg0: i32, %arg1: i32) -> (i32, i32) {
    %c0_i32 = arith.constant 0 : i32
    %c0_i32_0 = arith.constant 0 : i32
    %c0_i32_1 = arith.constant 0 : i32
    return %c0_i32, %c0_i32_0 : i32, i32
  }
  func.func @transform_6(%arg0: i32, %arg1: i32) -> (i32, i32) {
    %c0_i32 = arith.constant 0 : i32
    %c0_i32_0 = arith.constant 0 : i32
    %c0_i32_1 = arith.constant 0 : i32
    return %c0_i32, %c0_i32_0 : i32, i32
  }
  func.func @transform_7(%arg0: i32, %arg1: i32) -> (i32, i32) {
    %c0_i32 = arith.constant 0 : i32
    %c0_i32_0 = arith.constant 0 : i32
    %c0_i32_1 = arith.constant 0 : i32
    return %c0_i32, %c0_i32_0 : i32, i32
  }
  func.func @transform_8(%arg0: i32, %arg1: i32) -> (i32, i32) {
    %c0_i32 = arith.constant 0 : i32
    %c0_i32_0 = arith.constant 0 : i32
    %c0_i32_1 = arith.constant 0 : i32
    return %c0_i32, %c0_i32_0 : i32, i32
  }
  func.func @transform_9(%arg0: i32, %arg1: i32) -> (i32, i32, i32) {
    %c0_i32 = arith.constant 0 : i32
    %c0_i32_0 = arith.constant 0 : i32
    return %arg0, %arg1, %c0_i32 : i32, i32, i32
  }
}

</mosaic_0001>

<llo_original>
// kernel: tpu_custom_call.1
$region0: #{tpu_custom_call.1}
  #allocation0 [shape = 'u32[]', space=smem, size = 0x4, offset = 0x4, fixed_abs, tag = 'smem constant byte address 0x4 - core index']
  #allocation1 [shape = 'u32[72,128]{1,0:T(1,128)}', space=vmem, size = 0x9000, scoped, tag = 'internal scratch']
  %s0 = inlined_call_operand.vmem [shape: f32[2,8,32], index: 0, kind: input, shape index: {}]
  %s1 = inlined_call_operand.hbm [shape: f32[2,8,32], index: 1, kind: input, shape index: {}]
  %s2 = inlined_call_operand.vmem [shape: s32[2,8,1], index: 2, kind: input, shape index: {}]
  %s3 = inlined_call_operand.hbm [shape: f32[32,32], index: 3, kind: input, shape index: {}]
  %s4 = inlined_call_operand.hbm [shape: f32[32,32], index: 4, kind: input, shape index: {}]
  %s5 = inlined_call_operand.hbm [shape: f32[32,32], index: 5, kind: input, shape index: {}]
  %s6 = inlined_call_operand.hbm [shape: f32[32,32], index: 6, kind: input, shape index: {}]
  %s7 = inlined_call_operand.vmem [shape: f32[1,32], index: 7, kind: input, shape index: {}]
  %s8 = inlined_call_operand.vmem [shape: f32[1,32], index: 8, kind: input, shape index: {}]
  %s9 = inlined_call_operand.hbm [shape: f32[2,8,32], index: 9, kind: output, shape index: {}]
  %s10 = sld [smem:[#allocation0]]
  $region89: #{tpu_custom_call.1} parent=0
    _
  %s12 = ssub.s32 1, %s10
  %s13 = scalar_select 0, %s12, %s10
  $region1: #{tpu_custom_call.1} parent=0
    #allocation2 [shape = 'u8[8192]{0}', space=vmem, size = 0x2000, scoped, tag = 'input window, operand 1']
    #allocation3 [shape = 's32[2]{0}', space=sflag, size = 0x8, scoped, tag = 'scoped memory for tpu_custom_call.1']
    #allocation4 [shape = 's32[2]{0}', space=sflag, size = 0x8, scoped, tag = 'scoped memory for tpu_custom_call.1']
    #allocation5 [shape = 'u8[16384]{0}', space=vmem, size = 0x4000, scoped, tag = 'input window, operand 3, single buffered']
    #allocation6 [shape = 's32[1]{0}', space=sflag, size = 0x4, scoped, tag = 'scoped memory for tpu_custom_call.1']
    #allocation7 [shape = 'u8[16384]{0}', space=vmem, size = 0x4000, scoped, tag = 'input window, operand 4, single buffered']
    #allocation8 [shape = 'u8[16384]{0}', space=vmem, size = 0x4000, scoped, tag = 'input window, operand 5, single buffered']
    #allocation9 [shape = 's32[1]{0}', space=sflag, size = 0x4, scoped, tag = 'scoped memory for tpu_custom_call.1']
    #allocation10 [shape = 'u8[16384]{0}', space=vmem, size = 0x4000, scoped, tag = 'input window, operand 6, single buffered']
    #allocation11 [shape = 'u8[8192]{0}', space=vmem, size = 0x2000, scoped, tag = 'output window, operand 0']
    %14 = vsyncpa [#allocation3], 0
    %s15 = scalar_lea.sflag [#allocation3], 1
    %16 = vsyncpa %s15, 0
    %17 = vsyncpa [#allocation6], 0
    %18 = vsyncpa [#allocation9], 0
    %19 = vsyncpa [#allocation4], 0
    %s20 = scalar_lea.sflag [#allocation4], 1
    %21 = vsyncpa %s20, 0
    loop: start=0, step=1, limit=4
    $region2: #{tpu_custom_call.1} parent=1 // loop_pre_header
      _
    $region3: #{tpu_custom_call.1} parent=1 // loop_header
      %s23 = sphi 0, %s27
      %p24 = scmp.ge.s32.totalorder %s23, 4
      %s30 = sphi 0, %s42
      %s31 = sphi 0, %s38
      %s32 = sphi 0, %s30
      %s33 = sphi 0, %s31
      %s34 = sphi 0, %s32
      %s35 = sphi 0, %s33
      %s47 = sphi 0, %s49
      %s50 = sphi 0, %s47
      %s51 = sphi 0, %s50
      %s67 = sphi 0, %s51
      %s73 = sphi 0, %s75
      %s76 = sphi 0, %s73
      %s77 = sphi 0, %s76
      %s93 = sphi 0, %s77
      %s101 = sphi 0, %s103
      %s104 = sphi 0, %s101
      %s105 = sphi 0, %s104
      %s121 = sphi 0, %s105
      %s125 = sphi 0, %s125
      %s127 = sphi 0, %s125
      %s128 = sphi 0, %s127
      %s142 = sphi 0, %s128
      %s146 = sphi 0, %s146
      %s148 = sphi 0, %s146
      %s149 = sphi 0, %s148
      %s163 = sphi 0, %s149
      %s167 = sphi 0, %s167
      %s169 = sphi 0, %s167
      %s170 = sphi 0, %s169
      %s184 = sphi 0, %s170
      %s188 = sphi 0, %s188
      %s190 = sphi 0, %s188
      %s191 = sphi 0, %s190
      %s205 = sphi 0, %s191
      %s209 = sphi 0, %s209
      %s211 = sphi 0, %s209
      %s212 = sphi 0, %s211
      %s226 = sphi 0, %s212
      %s230 = sphi 0, %s230
      %s232 = sphi 0, %s230
      %s233 = sphi 0, %s232
      %s247 = sphi 0, %s233
      %s255 = sphi 0, %s257
      %s258 = sphi 0, %s255
      %s259 = sphi 0, %s258
      %s275 = sphi 0, %s259
    $region4: #{tpu_custom_call.1} parent=1 // loop_header_branch
      %26 = sbr.rel (%p24) target = $region8
    $region5: #{tpu_custom_call.1} parent=1 // loop_body
      %s28 = ssub.s32 %s23, 1
      %s29 = ssub.s32 %s23, 2
      %s36 = sadd.s32 1, %s31
      %p37 = scmp.ge.s32.totalorder %s36, 1
      %s38 = scalar_select %p37, 0, %s36
      %s39 = sadd.s32 1, %s30
      %s40 = scalar_select %p37, %s39, %s30
      %p41 = scmp.ge.s32.totalorder %s40, 2
      %s42 = scalar_select %p41, 0, %s40
      %s43 = ssub.s32 %s30, %s42
      %s44 = ssub.s32 %s31, %s38
      %s45 = sor.u32 %s43, %s44
      %p46 = scmp.eq.s32.totalorder %s45, 0
      %s48 = sadd.s32 %s47, 1
      %s49 = scalar_select %p46, %s47, %s48
      %p52 = pneg %p46
      %p53 = scmp.eq.s32.totalorder %s23, 1
      %p54 = por %p52, %p53
      %p55 = scmp.ne.s32.totalorder %s47, %s50
      %p56 = scmp.eq.s32.totalorder %s23, 0
      %p57 = por %p55, %p56
      %p58 = scmp.ne.s32.totalorder %s47, %s50
      %p59 = scmp.eq.s32.totalorder %s28, 1
      %p60 = por %p58, %p59
      %p61 = scmp.ne.s32.totalorder %s50, %s51
      %p62 = scmp.eq.s32.totalorder %s28, 0
      %p63 = por %p61, %p62
      %p64 = scmp.ne.s32.totalorder %s50, %s51
      %p65 = scmp.eq.s32.totalorder %s29, 1
      %p66 = por %p64, %p65
      %p68 = scmp.ne.s32.totalorder %s51, %s67
      %p69 = scmp.eq.s32.totalorder %s29, 0
      %p70 = por %p68, %p69
      %s71 = ssub.s32 %s30, %s42
      %p72 = scmp.eq.s32.totalorder %s71, 0
      %s74 = sadd.s32 %s73, 1
      %s75 = scalar_select %p72, %s73, %s74
      %p78 = pneg %p72
      %p79 = scmp.eq.s32.totalorder %s23, 1
      %p80 = por %p78, %p79
      %p81 = scmp.ne.s32.totalorder %s73, %s76
      %p82 = scmp.eq.s32.totalorder %s23, 0
      %p83 = por %p81, %p82
      %p84 = scmp.ne.s32.totalorder %s73, %s76
      %p85 = scmp.eq.s32.totalorder %s28, 1
      %p86 = por %p84, %p85
      %p87 = scmp.ne.s32.totalorder %s76, %s77
      %p88 = scmp.eq.s32.totalorder %s28, 0
      %p89 = por %p87, %p88
      %p90 = scmp.ne.s32.totalorder %s76, %s77
      %p91 = scmp.eq.s32.totalorder %s29, 1
      %p92 = por %p90, %p91
      %p94 = scmp.ne.s32.totalorder %s77, %s93
      %p95 = scmp.eq.s32.totalorder %s29, 0
      %p96 = por %p94, %p95
      %s97 = ssub.s32 %s30, %s42
      %s98 = ssub.s32 %s31, %s38
      %s99 = sor.u32 %s97, %s98
      %p100 = scmp.eq.s32.totalorder %s99, 0
      %s102 = sadd.s32 %s101, 1
      %s103 = scalar_select %p100, %s101, %s102
      %p106 = pneg %p100
      %p107 = scmp.eq.s32.totalorder %s23, 1
      %p108 = por %p106, %p107
      %p109 = scmp.ne.s32.totalorder %s101, %s104
      %p110 = scmp.eq.s32.totalorder %s23, 0
      %p111 = por %p109, %p110
      %p112 = scmp.ne.s32.totalorder %s101, %s104
      %p113 = scmp.eq.s32.totalorder %s28, 1
      %p114 = por %p112, %p113
      %p115 = scmp.ne.s32.totalorder %s104, %s105
      %p116 = scmp.eq.s32.totalorder %s28, 0
      %p117 = por %p115, %p116
      %p118 = scmp.ne.s32.totalorder %s104, %s105
      %p119 = scmp.eq.s32.totalorder %s29, 1
      %p120 = por %p118, %p119
      %p122 = scmp.ne.s32.totalorder %s105, %s121
      %p123 = scmp.eq.s32.totalorder %s29, 0
      %p124 = por %p122, %p123
      %s126 = sadd.s32 %s125, 1
      %p129 = scmp.eq.s32.totalorder %s23, 1
      %p130 = scmp.ne.s32.totalorder %s125, %s127
      %p131 = scmp.eq.s32.totalorder %s23, 0
      %p132 = por %p130, %p131
      %p133 = scmp.ne.s32.totalorder %s125, %s127
      %p134 = scmp.eq.s32.totalorder %s28, 1
      %p135 = por %p133, %p134
      %p136 = scmp.ne.s32.totalorder %s127, %s128
      %p137 = scmp.eq.s32.totalorder %s28, 0
      %p138 = por %p136, %p137
      %p139 = scmp.ne.s32.totalorder %s127, %s128
      %p140 = scmp.eq.s32.totalorder %s29, 1
      %p141 = por %p139, %p140
      %p143 = scmp.ne.s32.totalorder %s128, %s142
      %p144 = scmp.eq.s32.totalorder %s29, 0
      %p145 = por %p143, %p144
      %s147 = sadd.s32 %s146, 1
      %p150 = scmp.eq.s32.totalorder %s23, 1
      %p151 = scmp.ne.s32.totalorder %s146, %s148
      %p152 = scmp.eq.s32.totalorder %s23, 0
      %p153 = por %p151, %p152
      %p154 = scmp.ne.s32.totalorder %s146, %s148
      %p155 = scmp.eq.s32.totalorder %s28, 1
      %p156 = por %p154, %p155
      %p157 = scmp.ne.s32.totalorder %s148, %s149
      %p158 = scmp.eq.s32.totalorder %s28, 0
      %p159 = por %p157, %p158
      %p160 = scmp.ne.s32.totalorder %s148, %s149
      %p161 = scmp.eq.s32.totalorder %s29, 1
      %p162 = por %p160, %p161
      %p164 = scmp.ne.s32.totalorder %s149, %s163
      %p165 = scmp.eq.s32.totalorder %s29, 0
      %p166 = por %p164, %p165
      %s168 = sadd.s32 %s167, 1
      %p171 = scmp.eq.s32.totalorder %s23, 1
      %p172 = scmp.ne.s32.totalorder %s167, %s169
      %p173 = scmp.eq.s32.totalorder %s23, 0
      %p174 = por %p172, %p173
      %p175 = scmp.ne.s32.totalorder %s167, %s169
      %p176 = scmp.eq.s32.totalorder %s28, 1
      %p177 = por %p175, %p176
      %p178 = scmp.ne.s32.totalorder %s169, %s170
      %p179 = scmp.eq.s32.totalorder %s28, 0
      %p180 = por %p178, %p179
      %p181 = scmp.ne.s32.totalorder %s169, %s170
      %p182 = scmp.eq.s32.totalorder %s29, 1
      %p183 = por %p181, %p182
      %p185 = scmp.ne.s32.totalorder %s170, %s184
      %p186 = scmp.eq.s32.totalorder %s29, 0
      %p187 = por %p185, %p186
      %s189 = sadd.s32 %s188, 1
      %p192 = scmp.eq.s32.totalorder %s23, 1
      %p193 = scmp.ne.s32.totalorder %s188, %s190
      %p194 = scmp.eq.s32.totalorder %s23, 0
      %p195 = por %p193, %p194
      %p196 = scmp.ne.s32.totalorder %s188, %s190
      %p197 = scmp.eq.s32.totalorder %s28, 1
      %p198 = por %p196, %p197
      %p199 = scmp.ne.s32.totalorder %s190, %s191
      %p200 = scmp.eq.s32.totalorder %s28, 0
      %p201 = por %p199, %p200
      %p202 = scmp.ne.s32.totalorder %s190, %s191
      %p203 = scmp.eq.s32.totalorder %s29, 1
      %p204 = por %p202, %p203
      %p206 = scmp.ne.s32.totalorder %s191, %s205
      %p207 = scmp.eq.s32.totalorder %s29, 0
      %p208 = por %p206, %p207
      %s210 = sadd.s32 %s209, 1
      %p213 = scmp.eq.s32.totalorder %s23, 1
      %p214 = scmp.ne.s32.totalorder %s209, %s211
      %p215 = scmp.eq.s32.totalorder %s23, 0
      %p216 = por %p214, %p215
      %p217 = scmp.ne.s32.totalorder %s209, %s211
      %p218 = scmp.eq.s32.totalorder %s28, 1
      %p219 = por %p217, %p218
      %p220 = scmp.ne.s32.totalorder %s211, %s212
      %p221 = scmp.eq.s32.totalorder %s28, 0
      %p222 = por %p220, %p221
      %p223 = scmp.ne.s32.totalorder %s211, %s212
      %p224 = scmp.eq.s32.totalorder %s29, 1
      %p225 = por %p223, %p224
      %p227 = scmp.ne.s32.totalorder %s212, %s226
      %p228 = scmp.eq.s32.totalorder %s29, 0
      %p229 = por %p227, %p228
      %s231 = sadd.s32 %s230, 1
      %p234 = scmp.eq.s32.totalorder %s23, 1
      %p235 = scmp.ne.s32.totalorder %s230, %s232
      %p236 = scmp.eq.s32.totalorder %s23, 0
      %p237 = por %p235, %p236
      %p238 = scmp.ne.s32.totalorder %s230, %s232
      %p239 = scmp.eq.s32.totalorder %s28, 1
      %p240 = por %p238, %p239
      %p241 = scmp.ne.s32.totalorder %s232, %s233
      %p242 = scmp.eq.s32.totalorder %s28, 0
      %p243 = por %p241, %p242
      %p244 = scmp.ne.s32.totalorder %s232, %s233
      %p245 = scmp.eq.s32.totalorder %s29, 1
      %p246 = por %p244, %p245
      %p248 = scmp.ne.s32.totalorder %s233, %s247
      %p249 = scmp.eq.s32.totalorder %s29, 0
      %p250 = por %p248, %p249
      %s251 = ssub.s32 %s30, %s42
      %s252 = ssub.s32 %s31, %s38
      %s253 = sor.u32 %s251, %s252
      %p254 = scmp.eq.s32.totalorder %s253, 0
      %s256 = sadd.s32 %s255, 1
      %s257 = scalar_select %p254, %s255, %s256
      %p260 = pneg %p254
      %p261 = scmp.eq.s32.totalorder %s23, 1
      %p262 = por %p260, %p261
      %p263 = scmp.ne.s32.totalorder %s255, %s258
      %p264 = scmp.eq.s32.totalorder %s23, 0
      %p265 = por %p263, %p264
      %p266 = scmp.ne.s32.totalorder %s255, %s258
      %p267 = scmp.eq.s32.totalorder %s28, 1
      %p268 = por %p266, %p267
      %p269 = scmp.ne.s32.totalorder %s258, %s259
      %p270 = scmp.eq.s32.totalorder %s28, 0
      %p271 = por %p269, %p270
      %p272 = scmp.ne.s32.totalorder %s258, %s259
      %p273 = scmp.eq.s32.totalorder %s29, 1
      %p274 = por %p272, %p273
      %p276 = scmp.ne.s32.totalorder %s259, %s275
      %p277 = scmp.eq.s32.totalorder %s29, 0
      %p278 = por %p276, %p277
      %p279 = scmp.le.s32.totalorder 1, %s23
      %p280 = scmp.lt.s32.totalorder %s23, 3
      %p281 = pnand %p279, %p280
      %p282 = pneg %p281
      // Predicated region
      $region9: #{tpu_custom_call.1} parent=5 // pred_check
        _
      $region10: #{tpu_custom_call.1} parent=5 // pred_check_branch
        %284 = sbr.rel (%p281) target = $region12
      $region11: #{tpu_custom_call.1} parent=5 // pred_region
        %s285 = ssub.s32 %s23, 1
        // Predicated region
        $region13: #{tpu_custom_call.1} parent=11 // pred_check
          %p286 = pneg %p138
        $region14: #{tpu_custom_call.1} parent=11 // pred_check_branch
          %288 = sbr.rel (%p286) target = $region16
        $region15: #{tpu_custom_call.1} parent=11 // pred_region
          %290 = vsyncadd [#allocation6], 0
          %s291 = sshll.u32 %s3, 4
          %s292 = int_to_ptr.hbm [resolvable:$true] %s291
          %s293 = sshll.u32 [#allocation5], 4
          %s294 = int_to_ptr.vmem [resolvable:$true] %s293
          %299 = dma.hbm_to_vmem [thread:$0]  %s292, 512, %s294, [#allocation6], 128, 128, 8
        $region16: #{tpu_custom_call.1} parent=11 // pred_fallthru
          _
        // Predicated region
        $region17: #{tpu_custom_call.1} parent=11 // pred_check
          %p300 = pneg %p159
        $region18: #{tpu_custom_call.1} parent=11 // pred_check_branch
          %302 = sbr.rel (%p300) target = $region20
        $region19: #{tpu_custom_call.1} parent=11 // pred_region
          %304 = vsyncadd [#allocation6], 0
          %s305 = sshll.u32 %s4, 4
          %s306 = int_to_ptr.hbm [resolvable:$true] %s305
          %s307 = sshll.u32 [#allocation7], 4
          %s308 = int_to_ptr.vmem [resolvable:$true] %s307
          %313 = dma.hbm_to_vmem [thread:$0]  %s306, 512, %s308, [#allocation6], 128, 128, 8
        $region20: #{tpu_custom_call.1} parent=11 // pred_fallthru
          _
        // Predicated region
        $region21: #{tpu_custom_call.1} parent=11 // pred_check
          %p314 = pneg %p180
        $region22: #{tpu_custom_call.1} parent=11 // pred_check_branch
          %316 = sbr.rel (%p314) target = $region24
        $region23: #{tpu_custom_call.1} parent=11 // pred_region
          %318 = vsyncadd [#allocation9], 0
          %s319 = sshll.u32 %s5, 4
          %s320 = int_to_ptr.hbm [resolvable:$true] %s319
          %s321 = sshll.u32 [#allocation8], 4
          %s322 = int_to_ptr.vmem [resolvable:$true] %s321
          %327 = dma.hbm_to_vmem [thread:$0]  %s320, 512, %s322, [#allocation9], 128, 128, 8
        $region24: #{tpu_custom_call.1} parent=11 // pred_fallthru
          _
        // Predicated region
        $region25: #{tpu_custom_call.1} parent=11 // pred_check
          %p328 = pneg %p201
        $region26: #{tpu_custom_call.1} parent=11 // pred_check_branch
          %330 = sbr.rel (%p328) target = $region28
        $region27: #{tpu_custom_call.1} parent=11 // pred_region
          %332 = vsyncadd [#allocation9], 0
          %s333 = sshll.u32 %s6, 4
          %s334 = int_to_ptr.hbm [resolvable:$true] %s333
          %s335 = sshll.u32 [#allocation10], 4
          %s336 = int_to_ptr.vmem [resolvable:$true] %s335
          %341 = dma.hbm_to_vmem [thread:$0]  %s334, 512, %s336, [#allocation9], 128, 128, 8
        $region28: #{tpu_custom_call.1} parent=11 // pred_fallthru
          _
        // Predicated region
        $region29: #{tpu_custom_call.1} parent=11 // pred_check
          %p342 = pneg %p222
        $region30: #{tpu_custom_call.1} parent=11 // pred_check_branch
          %344 = sbr.rel (%p342) target = $region32
        $region31: #{tpu_custom_call.1} parent=11 // pred_region
          _
        $region32: #{tpu_custom_call.1} parent=11 // pred_fallthru
          _
        // Predicated region
        $region33: #{tpu_custom_call.1} parent=11 // pred_check
          %p345 = pneg %p243
        $region34: #{tpu_custom_call.1} parent=11 // pred_check_branch
          %347 = sbr.rel (%p345) target = $region36
        $region35: #{tpu_custom_call.1} parent=11 // pred_region
          _
        $region36: #{tpu_custom_call.1} parent=11 // pred_fallthru
          _
      $region12: #{tpu_custom_call.1} parent=5 // pred_fallthru
        _
      %p348 = scmp.lt.s32.totalorder %s23, 2
      // Predicated region
      $region37: #{tpu_custom_call.1} parent=5 // pred_check
        %p349 = pneg %p348
      $region38: #{tpu_custom_call.1} parent=5 // pred_check_branch
        %351 = sbr.rel (%p349) target = $region40
      $region39: #{tpu_custom_call.1} parent=5 // pred_region
        // Predicated region
        $region41: #{tpu_custom_call.1} parent=39 // pred_check
          %p352 = pneg %p57
        $region42: #{tpu_custom_call.1} parent=39 // pred_check_branch
          %354 = sbr.rel (%p352) target = $region44
        $region43: #{tpu_custom_call.1} parent=39 // pred_region
          %p355 = scmp.lt.s32.totalorder %s30, 1
          %s356 = scalar_select %p355, %s30, 1
          %p357 = scmp.lt.s32.totalorder %s31, 0
          %s358 = scalar_select %p357, %s31, 0
          %s359 = sadd.s32 %s358, %s356
          %s360 = smul.addr %s359, 8
          %s361 = scalar_lea.vmem %s0, %s360
        $region44: #{tpu_custom_call.1} parent=39 // pred_fallthru
          _
        // Predicated region
        $region45: #{tpu_custom_call.1} parent=39 // pred_check
          %p362 = pneg %p83
        $region46: #{tpu_custom_call.1} parent=39 // pred_check_branch
          %364 = sbr.rel (%p362) target = $region48
        $region47: #{tpu_custom_call.1} parent=39 // pred_region
          %s365 = sand.u32 %s73, 1
          %s366 = scalar_lea.sflag [#allocation3], %s365
          %s367 = sand.u32 %s73, 1
          %s368 = smul.addr %s367, 8
          %s369 = scalar_lea.vmem [#allocation2], %s368
          %371 = vsyncadd %s366, 0
          %s372 = smul.addr %s30, 8
          %s373 = scalar_lea.hbm %s1, %s372
          %s375 = sshll.u32 %s373, 4
          %s376 = int_to_ptr.hbm [resolvable:$true] %s375
          %s377 = sshll.u32 %s369, 4
          %s378 = int_to_ptr.vmem [resolvable:$true] %s377
          %380 = dma.hbm_to_vmem [thread:$0]  %s376, 128, %s378, %s366
        $region48: #{tpu_custom_call.1} parent=39 // pred_fallthru
          _
        // Predicated region
        $region49: #{tpu_custom_call.1} parent=39 // pred_check
          %p381 = pneg %p111
        $region50: #{tpu_custom_call.1} parent=39 // pred_check_branch
          %383 = sbr.rel (%p381) target = $region52
        $region51: #{tpu_custom_call.1} parent=39 // pred_region
          %p384 = scmp.lt.s32.totalorder %s30, 1
          %s385 = scalar_select %p384, %s30, 1
          %p386 = scmp.lt.s32.totalorder %s31, 0
          %s387 = scalar_select %p386, %s31, 0
          %s388 = sadd.s32 %s387, %s385
          %s389 = smul.addr %s388, 8
          %s390 = scalar_lea.vmem %s2, %s389
        $region52: #{tpu_custom_call.1} parent=39 // pred_fallthru
          _
      $region40: #{tpu_custom_call.1} parent=5 // pred_fallthru
        _
      %p391 = scmp.le.s32.totalorder 1, %s23
      %p392 = scmp.lt.s32.totalorder %s23, 3
      %p393 = pnand %p391, %p392
      %p394 = pneg %p393
      // Predicated region
      $region53: #{tpu_custom_call.1} parent=5 // pred_check
        _
      $region54: #{tpu_custom_call.1} parent=5 // pred_check_branch
        %396 = sbr.rel (%p393) target = $region56
      $region55: #{tpu_custom_call.1} parent=5 // pred_region
        %s397 = ssub.s32 %s23, 1
        %s398 = sand.u32 %s76, 1
        %s399 = scalar_lea.sflag [#allocation3], %s398
        %s400 = sand.u32 %s76, 1
        %s401 = smul.addr %s400, 8
        %s402 = scalar_lea.vmem [#allocation2], %s401
        // Predicated region
        $region57: #{tpu_custom_call.1} parent=55 // pred_check
          %p403 = pneg %p89
        $region58: #{tpu_custom_call.1} parent=55 // pred_check_branch
          %405 = sbr.rel (%p403) target = $region60
        $region59: #{tpu_custom_call.1} parent=55 // pred_region
          %407 = dma.done %s399, 128
        $region60: #{tpu_custom_call.1} parent=55 // pred_fallthru
          _
        // Predicated region
        $region61: #{tpu_custom_call.1} parent=55 // pred_check
          %p408 = pneg %p138
        $region62: #{tpu_custom_call.1} parent=55 // pred_check_branch
          %410 = sbr.rel (%p408) target = $region64
        $region63: #{tpu_custom_call.1} parent=55 // pred_region
          %412 = dma.done [#allocation6], 512
        $region64: #{tpu_custom_call.1} parent=55 // pred_fallthru
          _
        // Predicated region
        $region65: #{tpu_custom_call.1} parent=55 // pred_check
          %p413 = pneg %p159
        $region66: #{tpu_custom_call.1} parent=55 // pred_check_branch
          %415 = sbr.rel (%p413) target = $region68
        $region67: #{tpu_custom_call.1} parent=55 // pred_region
          %417 = dma.done [#allocation6], 512
        $region68: #{tpu_custom_call.1} parent=55 // pred_fallthru
          _
        // Predicated region
        $region69: #{tpu_custom_call.1} parent=55 // pred_check
          %p418 = pneg %p180
        $region70: #{tpu_custom_call.1} parent=55 // pred_check_branch
          %420 = sbr.rel (%p418) target = $region72
        $region71: #{tpu_custom_call.1} parent=55 // pred_region
          %422 = dma.done [#allocation9], 512
        $region72: #{tpu_custom_call.1} parent=55 // pred_fallthru
          _
        // Predicated region
        $region73: #{tpu_custom_call.1} parent=55 // pred_check
          %p423 = pneg %p201
        $region74: #{tpu_custom_call.1} parent=55 // pred_check_branch
          %425 = sbr.rel (%p423) target = $region76
        $region75: #{tpu_custom_call.1} parent=55 // pred_region
          %427 = dma.done [#allocation9], 512
        $region76: #{tpu_custom_call.1} parent=55 // pred_fallthru
          _
        %p428 = scmp.lt.s32.totalorder %s32, 1
        %s429 = scalar_select %p428, %s32, 1
        %p430 = scmp.lt.s32.totalorder %s33, 0
        %s431 = scalar_select %p430, %s33, 0
        %s432 = sadd.s32 %s431, %s429
        %s433 = smul.addr %s432, 8
        %s434 = scalar_lea.vmem %s0, %s433
        %p435 = pneg %p63
        %p436 = pneg %p60
        %s437 = sand.u32 %s76, 1
        %s438 = scalar_lea.sflag [#allocation3], %s437
        %s439 = sand.u32 %s76, 1
        %s440 = smul.addr %s439, 8
        %s441 = scalar_lea.vmem [#allocation2], %s440
        %p442 = pneg %p89
        %p443 = pneg %p86
        %p444 = scmp.lt.s32.totalorder %s32, 1
        %s445 = scalar_select %p444, %s32, 1
        %p446 = scmp.lt.s32.totalorder %s33, 0
        %s447 = scalar_select %p446, %s33, 0
        %s448 = sadd.s32 %s447, %s445
        %s449 = smul.addr %s448, 8
        %s450 = scalar_lea.vmem %s2, %s449
        %p451 = pneg %p117
        %p452 = pneg %p114
        %p453 = pneg %p138
        %p454 = pneg %p135
        %p455 = pneg %p159
        %p456 = pneg %p156
        %p457 = pneg %p180
        %p458 = pneg %p177
        %p459 = pneg %p201
        %p460 = pneg %p198
        %p461 = pneg %p222
        %p462 = pneg %p219
        %p463 = pneg %p243
        %p464 = pneg %p240
        %p465 = pneg %p271
        %p466 = pneg %p268
        %s467 = sand.u32 %s258, 1
        %s468 = scalar_lea.sflag [#allocation4], %s467
        %s469 = sand.u32 %s258, 1
        %s470 = smul.addr %s469, 8
        %s471 = scalar_lea.vmem [#allocation11], %s470
        %p472 = scmp.lt.s32.totalorder %s32, 1
        %s473 = scalar_select %p472, %s32, 1
        %p474 = scmp.lt.s32.totalorder %s33, 0
        %s475 = scalar_select %p474, %s33, 0
        %s476 = sadd.s32 %s475, %s473
        %s477 = smul.addr %s476, 8
        %s478 = scalar_lea.vmem %s0, %s477
        %p479 = scmp.lt.s32.totalorder %s32, 1
        %s480 = scalar_select %p479, %s32, 1
        %p481 = scmp.lt.s32.totalorder %s33, 0
        %s482 = scalar_select %p481, %s33, 0
        %s483 = sadd.s32 %s482, %s480
        %s484 = smul.addr %s483, 8
        %s485 = scalar_lea.vmem %s2, %s484
        %v486 = vld [vmem:[%s478] sm:$0xff]
        %v487 = vld [vmem:[%s402] sm:$0xff]
        %v488 = vld [vmem:[#allocation5] sm:$0xff]
        %v489 = vld [vmem:[#allocation5 + $0x8] sm:$0xff]
        %v490 = vld [vmem:[#allocation5 + $0x10] sm:$0xff]
        %v491 = vld [vmem:[#allocation5 + $0x18] sm:$0xff]
        %vm492 = vcmask 261120
        %v494 = vsel %vm492, %v486, 0
        %496 = vmatpush.msra.mxu0 0.0
        %497 = vmatpush.msra.mxu0 0.0
        %498 = vmatpush.msra.mxu0 0.0
        %499 = vmatpush.msra.mxu0 0.0
        %500 = vmatpush.msra.mxu0 0.0
        %501 = vmatpush.msra.mxu0 0.0
        %502 = vmatpush.msra.mxu0 0.0
        %503 = vmatpush.msra.mxu0 0.0
        %504 = vmatpush.msra.mxu0 0.0
        %505 = vmatpush.msra.mxu0 0.0
        %506 = vmatpush.msra.mxu0 0.0
        %507 = vmatpush.msra.mxu0 0.0
        %508 = vmatpush.msra.mxu0 %v491
        %509 = vmatpush.msra.mxu0 %v490
        %510 = vmatpush.msra.mxu0 %v489
        %511 = vmatpush.msra.mxu0 %v488
        %512 = vmatmul.f32.gmra.mxu0 %v494
        %v513 = vpop.f32.mrf.mxu0
        %v514 = vadd.f32 0.0, %v513
        %515 = vdwg.mxu0
        %v516 = vld [vmem:[#allocation7] sm:$0xff]
        %v517 = vld [vmem:[#allocation7 + $0x8] sm:$0xff]
        %v518 = vld [vmem:[#allocation7 + $0x10] sm:$0xff]
        %v519 = vld [vmem:[#allocation7 + $0x18] sm:$0xff]
        %v521 = vsel %vm492, %v487, 0
        %523 = vmatpush.msra.mxu0 0.0
        %524 = vmatpush.msra.mxu0 0.0
        %525 = vmatpush.msra.mxu0 0.0
        %526 = vmatpush.msra.mxu0 0.0
        %527 = vmatpush.msra.mxu0 0.0
        %528 = vmatpush.msra.mxu0 0.0
        %529 = vmatpush.msra.mxu0 0.0
        %530 = vmatpush.msra.mxu0 0.0
        %531 = vmatpush.msra.mxu0 0.0
        %532 = vmatpush.msra.mxu0 0.0
        %533 = vmatpush.msra.mxu0 0.0
        %534 = vmatpush.msra.mxu0 0.0
        %535 = vmatpush.msra.mxu0 %v519
        %536 = vmatpush.msra.mxu0 %v518
        %537 = vmatpush.msra.mxu0 %v517
        %538 = vmatpush.msra.mxu0 %v516
        %539 = vmatmul.f32.gmra.mxu0 %v521
        %v540 = vpop.f32.mrf.mxu0
        %v541 = vadd.f32 0.0, %v540
        %542 = vdwg.mxu0
        %v543 = vld [vmem:[#allocation8] sm:$0xff]
        %v544 = vld [vmem:[#allocation8 + $0x8] sm:$0xff]
        %v545 = vld [vmem:[#allocation8 + $0x10] sm:$0xff]
        %v546 = vld [vmem:[#allocation8 + $0x18] sm:$0xff]
        %547 = vmatpush.msra.mxu0 0.0
        %548 = vmatpush.msra.mxu0 0.0
        %549 = vmatpush.msra.mxu0 0.0
        %550 = vmatpush.msra.mxu0 0.0
        %551 = vmatpush.msra.mxu0 0.0
        %552 = vmatpush.msra.mxu0 0.0
        %553 = vmatpush.msra.mxu0 0.0
        %554 = vmatpush.msra.mxu0 0.0
        %555 = vmatpush.msra.mxu0 0.0
        %556 = vmatpush.msra.mxu0 0.0
        %557 = vmatpush.msra.mxu0 0.0
        %558 = vmatpush.msra.mxu0 0.0
        %559 = vmatpush.msra.mxu0 %v546
        %560 = vmatpush.msra.mxu0 %v545
        %561 = vmatpush.msra.mxu0 %v544
        %562 = vmatpush.msra.mxu0 %v543
        %563 = vmatmul.f32.gmra.mxu0 %v521
        %v564 = vpop.f32.mrf.mxu0
        %v565 = vadd.f32 0.0, %v564
        %566 = vdwg.mxu0
        %v567 = vld [vmem:[%s485] sm:$0xff]
        %v568 = vlaneseq
        %v569 = vand.u32 %v568, 127
        %570 = vset.pattern.permute.xlu0 0
        %571 = vperm.xlu0 %570, %v567
        %v572 = vpop.permute.xlu0 %571
        %vm573 = vcmp.lt.s32.totalorder %v569, %v572
        %vm574 = vcmask 64512
        %v576 = vsel %vm574, %v514, 0
        %v579 = vsel %vm574, %v541, 0
        %581 = vmatpush.xpose.msra.mxu0 0.0
        %582 = vmatpush.xpose.msra.mxu0 0.0
        %583 = vmatpush.xpose.msra.mxu0 0.0
        %584 = vmatpush.xpose.msra.mxu0 0.0
        %585 = vmatpush.xpose.msra.mxu0 0.0
        %586 = vmatpush.xpose.msra.mxu0 0.0
        %587 = vmatpush.xpose.msra.mxu0 0.0
        %588 = vmatpush.xpose.msra.mxu0 0.0
        %589 = vmatpush.xpose.msra.mxu0 0.0
        %590 = vmatpush.xpose.msra.mxu0 0.0
        %591 = vmatpush.xpose.msra.mxu0 0.0
        %592 = vmatpush.xpose.msra.mxu0 0.0
        %593 = vmatpush.xpose.msra.mxu0 0.0
        %594 = vmatpush.xpose.msra.mxu0 0.0
        %595 = vmatpush.xpose.msra.mxu0 0.0
        %596 = vmatpush.xpose.msra.mxu0 %v579
        %597 = vmatmul.f32.gmra.mxu0 %v576
        %v598 = vpop.f32.mrf.mxu0
        %v599 = vadd.f32 0.0, %v598
        %600 = vdwg.mxu0
        %v601 = vmul.f32 %v599, 0.35355338
        %v602 = vsel %vm573, %v601, -1000000.0
        %v603 = vsel %vm574, %v602, -inf
        %604 = vmax.xlane.f32.xlu0 %v603
        %v605 = vpop.xlane.xlu0 %604
        %v606 = vsub.f32 %v602, %v605
        %v607 = vmul.f32 %v606, 1.442695
        %v608 = vpow.pop %v607
        %v609 = vsel %vm574, %v608, 0.0
        %610 = vadd.xlane.f32.xlu0 %v609
        %v611 = vpop.xlane.xlu0 %610
        %v612 = vrcp.pop %v611
        %v613 = vmul.f32 %v611, %v612
        %v614 = vsub.f32 2.0, %v613
        %v615 = vmul.f32 %v612, %v614
        %v616 = vmul.f32 %v608, %v615
        %v618 = vsel %vm574, %v616, 0
        %620 = vmatpush.msra.mxu0 0.0
        %621 = vmatpush.msra.mxu0 0.0
        %622 = vmatpush.msra.mxu0 0.0
        %623 = vmatpush.msra.mxu0 0.0
        %624 = vmatpush.msra.mxu0 0.0
        %625 = vmatpush.msra.mxu0 0.0
        %626 = vmatpush.msra.mxu0 0.0
        %627 = vmatpush.msra.mxu0 0.0
        %628 = vmatpush.msra.mxu0 0.0
        %629 = vmatpush.msra.mxu0 0.0
        %630 = vmatpush.msra.mxu0 0.0
        %631 = vmatpush.msra.mxu0 0.0
        %632 = vmatpush.msra.mxu0 0.0
        %633 = vmatpush.msra.mxu0 0.0
        %634 = vmatpush.msra.mxu0 0.0
        %635 = vmatpush.msra.mxu0 %v565
        %636 = vmatmul.f32.gmra.mxu0 %v618
        %v637 = vpop.f32.mrf.mxu0
        %v638 = vadd.f32 0.0, %v637
        %639 = vdwg.mxu0
        %640 = vrot.lane.b32.xlu0 %v514, 120
        %v641 = vpop.permute.xlu0 %640
        %642 = vrot.lane.b32.xlu0 %v541, 120
        %v643 = vpop.permute.xlu0 %642
        %v644 = vsel %vm574, %v641, 0
        %v646 = vsel %vm574, %v643, 0
        %648 = vmatpush.xpose.msra.mxu0 0.0
        %649 = vmatpush.xpose.msra.mxu0 0.0
        %650 = vmatpush.xpose.msra.mxu0 0.0
        %651 = vmatpush.xpose.msra.mxu0 0.0
        %652 = vmatpush.xpose.msra.mxu0 0.0
        %653 = vmatpush.xpose.msra.mxu0 0.0
        %654 = vmatpush.xpose.msra.mxu0 0.0
        %655 = vmatpush.xpose.msra.mxu0 0.0
        %656 = vmatpush.xpose.msra.mxu0 0.0
        %657 = vmatpush.xpose.msra.mxu0 0.0
        %658 = vmatpush.xpose.msra.mxu0 0.0
        %659 = vmatpush.xpose.msra.mxu0 0.0
        %660 = vmatpush.xpose.msra.mxu0 0.0
        %661 = vmatpush.xpose.msra.mxu0 0.0
        %662 = vmatpush.xpose.msra.mxu0 0.0
        %663 = vmatpush.xpose.msra.mxu0 %v646
        %664 = vmatmul.f32.gmra.mxu0 %v644
        %v665 = vpop.f32.mrf.mxu0
        %v666 = vadd.f32 0.0, %v665
        %667 = vdwg.mxu0
        %v668 = vmul.f32 %v666, 0.35355338
        %v669 = vsel %vm573, %v668, -1000000.0
        %v670 = vsel %vm574, %v669, -inf
        %671 = vmax.xlane.f32.xlu0 %v670
        %v672 = vpop.xlane.xlu0 %671
        %v673 = vsub.f32 %v669, %v672
        %v674 = vmul.f32 %v673, 1.442695
        %v675 = vpow.pop %v674
        %v676 = vsel %vm574, %v675, 0.0
        %677 = vadd.xlane.f32.xlu0 %v676
        %v678 = vpop.xlane.xlu0 %677
        %v679 = vrcp.pop %v678
        %v680 = vmul.f32 %v678, %v679
        %v681 = vsub.f32 2.0, %v680
        %v682 = vmul.f32 %v679, %v681
        %v683 = vmul.f32 %v675, %v682
        %685 = vrot.lane.b32.xlu0 %v565, 120
        %v686 = vpop.permute.xlu0 %685
        %v689 = vsel %vm574, %v683, 0
        %691 = vmatpush.msra.mxu0 0.0
        %692 = vmatpush.msra.mxu0 0.0
        %693 = vmatpush.msra.mxu0 0.0
        %694 = vmatpush.msra.mxu0 0.0
        %695 = vmatpush.msra.mxu0 0.0
        %696 = vmatpush.msra.mxu0 0.0
        %697 = vmatpush.msra.mxu0 0.0
        %698 = vmatpush.msra.mxu0 0.0
        %699 = vmatpush.msra.mxu0 0.0
        %700 = vmatpush.msra.mxu0 0.0
        %701 = vmatpush.msra.mxu0 0.0
        %702 = vmatpush.msra.mxu0 0.0
        %703 = vmatpush.msra.mxu0 0.0
        %704 = vmatpush.msra.mxu0 0.0
        %705 = vmatpush.msra.mxu0 0.0
        %706 = vmatpush.msra.mxu0 %v686
        %707 = vmatmul.f32.gmra.mxu0 %v689
        %v708 = vpop.f32.mrf.mxu0
        %v709 = vadd.f32 0.0, %v708
        %710 = vdwg.mxu0
        %711 = vrot.lane.b32.xlu0 %v514, 112
        %v712 = vpop.permute.xlu0 %711
        %713 = vrot.lane.b32.xlu0 %v541, 112
        %v714 = vpop.permute.xlu0 %713
        %v715 = vsel %vm574, %v712, 0
        %v717 = vsel %vm574, %v714, 0
        %719 = vmatpush.xpose.msra.mxu0 0.0
        %720 = vmatpush.xpose.msra.mxu0 0.0
        %721 = vmatpush.xpose.msra.mxu0 0.0
        %722 = vmatpush.xpose.msra.mxu0 0.0
        %723 = vmatpush.xpose.msra.mxu0 0.0
        %724 = vmatpush.xpose.msra.mxu0 0.0
        %725 = vmatpush.xpose.msra.mxu0 0.0
        %726 = vmatpush.xpose.msra.mxu0 0.0
        %727 = vmatpush.xpose.msra.mxu0 0.0
        %728 = vmatpush.xpose.msra.mxu0 0.0
        %729 = vmatpush.xpose.msra.mxu0 0.0
        %730 = vmatpush.xpose.msra.mxu0 0.0
        %731 = vmatpush.xpose.msra.mxu0 0.0
        %732 = vmatpush.xpose.msra.mxu0 0.0
        %733 = vmatpush.xpose.msra.mxu0 0.0
        %734 = vmatpush.xpose.msra.mxu0 %v717
        %735 = vmatmul.f32.gmra.mxu0 %v715
        %v736 = vpop.f32.mrf.mxu0
        %v737 = vadd.f32 0.0, %v736
        %738 = vdwg.mxu0
        %v739 = vmul.f32 %v737, 0.35355338
        %v740 = vsel %vm573, %v739, -1000000.0
        %v741 = vsel %vm574, %v740, -inf
        %742 = vmax.xlane.f32.xlu0 %v741
        %v743 = vpop.xlane.xlu0 %742
        %v744 = vsub.f32 %v740, %v743
        %v745 = vmul.f32 %v744, 1.442695
        %v746 = vpow.pop %v745
        %v747 = vsel %vm574, %v746, 0.0
        %748 = vadd.xlane.f32.xlu0 %v747
        %v749 = vpop.xlane.xlu0 %748
        %v750 = vrcp.pop %v749
        %v751 = vmul.f32 %v749, %v750
        %v752 = vsub.f32 2.0, %v751
        %v753 = vmul.f32 %v750, %v752
        %v754 = vmul.f32 %v746, %v753
        %755 = vrot.lane.b32.xlu0 %v565, 112
        %v756 = vpop.permute.xlu0 %755
        %v759 = vsel %vm574, %v754, 0
        %761 = vmatpush.msra.mxu0 0.0
        %762 = vmatpush.msra.mxu0 0.0
        %763 = vmatpush.msra.mxu0 0.0
        %764 = vmatpush.msra.mxu0 0.0
        %765 = vmatpush.msra.mxu0 0.0
        %766 = vmatpush.msra.mxu0 0.0
        %767 = vmatpush.msra.mxu0 0.0
        %768 = vmatpush.msra.mxu0 0.0
        %769 = vmatpush.msra.mxu0 0.0
        %770 = vmatpush.msra.mxu0 0.0
        %771 = vmatpush.msra.mxu0 0.0
        %772 = vmatpush.msra.mxu0 0.0
        %773 = vmatpush.msra.mxu0 0.0
        %774 = vmatpush.msra.mxu0 0.0
        %775 = vmatpush.msra.mxu0 0.0
        %776 = vmatpush.msra.mxu0 %v756
        %777 = vmatmul.f32.gmra.mxu0 %v759
        %v778 = vpop.f32.mrf.mxu0
        %v779 = vadd.f32 0.0, %v778
        %780 = vdwg.mxu0
        %781 = vrot.lane.b32.xlu0 %v514, 104
        %v782 = vpop.permute.xlu0 %781
        %783 = vrot.lane.b32.xlu0 %v541, 104
        %v784 = vpop.permute.xlu0 %783
        %v785 = vsel %vm574, %v782, 0
        %v787 = vsel %vm574, %v784, 0
        %789 = vmatpush.xpose.msra.mxu0 0.0
        %790 = vmatpush.xpose.msra.mxu0 0.0
        %791 = vmatpush.xpose.msra.mxu0 0.0
        %792 = vmatpush.xpose.msra.mxu0 0.0
        %793 = vmatpush.xpose.msra.mxu0 0.0
        %794 = vmatpush.xpose.msra.mxu0 0.0
        %795 = vmatpush.xpose.msra.mxu0 0.0
        %796 = vmatpush.xpose.msra.mxu0 0.0
        %797 = vmatpush.xpose.msra.mxu0 0.0
        %798 = vmatpush.xpose.msra.mxu0 0.0
        %799 = vmatpush.xpose.msra.mxu0 0.0
        %800 = vmatpush.xpose.msra.mxu0 0.0
        %801 = vmatpush.xpose.msra.mxu0 0.0
        %802 = vmatpush.xpose.msra.mxu0 0.0
        %803 = vmatpush.xpose.msra.mxu0 0.0
        %804 = vmatpush.xpose.msra.mxu0 %v787
        %805 = vmatmul.f32.gmra.mxu0 %v785
        %v806 = vpop.f32.mrf.mxu0
        %v807 = vadd.f32 0.0, %v806
        %808 = vdwg.mxu0
        %v809 = vmul.f32 %v807, 0.35355338
        %v810 = vsel %vm573, %v809, -1000000.0
        %v811 = vsel %vm574, %v810, -inf
        %812 = vmax.xlane.f32.xlu0 %v811
        %v813 = vpop.xlane.xlu0 %812
        %v814 = vsub.f32 %v810, %v813
        %v815 = vmul.f32 %v814, 1.442695
        %v816 = vpow.pop %v815
        %v817 = vsel %vm574, %v816, 0.0
        %818 = vadd.xlane.f32.xlu0 %v817
        %v819 = vpop.xlane.xlu0 %818
        %v820 = vrcp.pop %v819
        %v821 = vmul.f32 %v819, %v820
        %v822 = vsub.f32 2.0, %v821
        %v823 = vmul.f32 %v820, %v822
        %v824 = vmul.f32 %v816, %v823
        %825 = vrot.lane.b32.xlu0 %v565, 104
        %v826 = vpop.permute.xlu0 %825
        %v829 = vsel %vm574, %v824, 0
        %831 = vmatpush.msra.mxu0 0.0
        %832 = vmatpush.msra.mxu0 0.0
        %833 = vmatpush.msra.mxu0 0.0
        %834 = vmatpush.msra.mxu0 0.0
        %835 = vmatpush.msra.mxu0 0.0
        %836 = vmatpush.msra.mxu0 0.0
        %837 = vmatpush.msra.mxu0 0.0
        %838 = vmatpush.msra.mxu0 0.0
        %839 = vmatpush.msra.mxu0 0.0
        %840 = vmatpush.msra.mxu0 0.0
        %841 = vmatpush.msra.mxu0 0.0
        %842 = vmatpush.msra.mxu0 0.0
        %843 = vmatpush.msra.mxu0 0.0
        %844 = vmatpush.msra.mxu0 0.0
        %845 = vmatpush.msra.mxu0 0.0
        %846 = vmatpush.msra.mxu0 %v826
        %847 = vmatmul.f32.gmra.mxu0 %v829
        %v848 = vpop.f32.mrf.mxu0
        %v849 = vadd.f32 0.0, %v848
        %850 = vdwg.mxu0
        %852 = vrot.lane.b32.xlu0 %v709, 8
        %v853 = vpop.permute.xlu0 %852
        %856 = vrot.lane.b32.xlu0 %v779, 16
        %v857 = vpop.permute.xlu0 %856
        %860 = vrot.lane.b32.xlu0 %v849, 24
        %v861 = vpop.permute.xlu0 %860
        %v863 = vsel %vm574, %v638, %v853
        %vm864 = vcmask 130048
        %v865 = vsel %vm864, %v863, %v857
        %vm866 = vcmask 195584
        %v867 = vsel %vm866, %v865, %v861
        %v868 = vld [vmem:[#allocation10] sm:$0xff]
        %v869 = vld [vmem:[#allocation10 + $0x8] sm:$0xff]
        %v870 = vld [vmem:[#allocation10 + $0x10] sm:$0xff]
        %v871 = vld [vmem:[#allocation10 + $0x18] sm:$0xff]
        %v873 = vsel %vm492, %v867, 0
        %875 = vmatpush.msra.mxu0 0.0
        %876 = vmatpush.msra.mxu0 0.0
        %877 = vmatpush.msra.mxu0 0.0
        %878 = vmatpush.msra.mxu0 0.0
        %879 = vmatpush.msra.mxu0 0.0
        %880 = vmatpush.msra.mxu0 0.0
        %881 = vmatpush.msra.mxu0 0.0
        %882 = vmatpush.msra.mxu0 0.0
        %883 = vmatpush.msra.mxu0 0.0
        %884 = vmatpush.msra.mxu0 0.0
        %885 = vmatpush.msra.mxu0 0.0
        %886 = vmatpush.msra.mxu0 0.0
        %887 = vmatpush.msra.mxu0 %v871
        %888 = vmatpush.msra.mxu0 %v870
        %889 = vmatpush.msra.mxu0 %v869
        %890 = vmatpush.msra.mxu0 %v868
        %891 = vmatmul.f32.gmra.mxu0 %v873
        %v892 = vpop.f32.mrf.mxu0
        %v893 = vadd.f32 0.0, %v892
        %894 = vdwg.mxu0
        %v895 = vadd.f32 %v486, %v893
        %v896 = vsel %vm492, %v895, 0.0
        %897 = vadd.xlane.f32.xlu0 %v896
        %v898 = vpop.xlane.xlu0 %897
        %v899 = vrcp.pop 32.0
        %v900 = vmul.f32 32.0, %v899
        %v901 = vsub.f32 1.0, %v900
        %v902 = vmul.f32 %v899, %v901
        %v903 = vadd.f32 %v899, %v902
        %vm904 = vweird.f32 %v899
        %v905 = vsel %vm904, %v899, %v903
        %v906 = vmul.f32 %v898, %v905
        %v907 = vsub.f32 %v895, %v906
        %v908 = vmul.f32 %v907, %v907
        %v909 = vsel %vm492, %v908, 0.0
        %910 = vadd.xlane.f32.xlu0 %v909
        %v911 = vpop.xlane.xlu0 %910
        %v912 = vmul.f32 %v911, %v905
        %v913 = vadd.f32 %v912, 1e-05
        %v914 = vrsqrt.pop %v913
        %v915 = vmul.f32 %v914, %v913
        %v916 = vmul.f32 %v915, %v914
        %v917 = vmul.f32 0.5, %v916
        %v918 = vsub.f32 1.5, %v917
        %v919 = vmul.f32 %v914, %v918
        %vm920 = vweird.f32 %v913
        %vm921 = vweird.f32 %v914
        %vm922 = vmor %vm920, %vm921
        %v923 = vsel %vm922, %v914, %v919
        %v924 = vmul.f32 %v907, %v923
        %v925 = vld [vmem:[%s7] sm:$0x1]
        %v927 = vperm.slane %v925, 0
        %v929 = vmul.f32 %v924, %v927
        %v930 = vld [vmem:[%s8] sm:$0x1]
        %v932 = vperm.slane %v930, 0
        %v934 = vadd.f32 %v929, %v932
        %935 = vst.msk [vmem:[%s471] sm:$0xff] %vm492, %v934
        %s936 = sand.u32 %s258, 1
        %s937 = scalar_lea.sflag [#allocation4], %s936
        %s938 = sand.u32 %s258, 1
        %s939 = smul.addr %s938, 8
        %s940 = scalar_lea.vmem [#allocation11], %s939
        // Predicated region
        $region77: #{tpu_custom_call.1} parent=55 // pred_check
          %p941 = pneg %p268
        $region78: #{tpu_custom_call.1} parent=55 // pred_check_branch
          %943 = sbr.rel (%p941) target = $region80
        $region79: #{tpu_custom_call.1} parent=55 // pred_region
          %945 = vsyncadd %s937, 0
          %s946 = sadd.s32 %s33, %s32
          %s947 = smul.addr %s946, 8
          %s948 = scalar_lea.hbm %s9, %s947
          %s950 = sshll.u32 %s940, 4
          %s951 = int_to_ptr.vmem [resolvable:$true] %s950
          %s952 = sshll.u32 %s948, 4
          %s953 = int_to_ptr.hbm [resolvable:$true] %s952
          %955 = dma.vmem_to_hbm [thread:$0]  %s951, 128, %s953, %s937
        $region80: #{tpu_custom_call.1} parent=55 // pred_fallthru
          _
      $region56: #{tpu_custom_call.1} parent=5 // pred_fallthru
        _
      %p956 = scmp.le.s32.totalorder 2, %s23
      // Predicated region
      $region81: #{tpu_custom_call.1} parent=5 // pred_check
        %p957 = pneg %p956
      $region82: #{tpu_custom_call.1} parent=5 // pred_check_branch
        %959 = sbr.rel (%p957) target = $region84
      $region83: #{tpu_custom_call.1} parent=5 // pred_region
        %s960 = ssub.s32 %s23, 2
        // Predicated region
        $region85: #{tpu_custom_call.1} parent=83 // pred_check
          %p961 = pneg %p274
        $region86: #{tpu_custom_call.1} parent=83 // pred_check_branch
          %963 = sbr.rel (%p961) target = $region88
        $region87: #{tpu_custom_call.1} parent=83 // pred_region
          %s964 = sand.u32 %s259, 1
          %s965 = scalar_lea.sflag [#allocation4], %s964
          %s966 = sand.u32 %s259, 1
          %s967 = smul.addr %s966, 8
          %s968 = scalar_lea.vmem [#allocation11], %s967
          %970 = dma.done %s965, 128
        $region88: #{tpu_custom_call.1} parent=83 // pred_fallthru
          _
      $region84: #{tpu_custom_call.1} parent=5 // pred_fallthru
        _
    $region6: #{tpu_custom_call.1} parent=1 // loop_footer
      %s27 = sadd.s32 1, %s23
    $region7: #{tpu_custom_call.1} parent=1 // loop_footer_branch
      %22 = sbr.rel target = $region3
    $region8: #{tpu_custom_call.1} parent=1 // loop_exit
      _
    %971 = vsyncpa [#allocation3], 1
    %s972 = scalar_lea.sflag [#allocation3], 1
    %973 = vsyncpa %s972, 1
    %974 = vsyncpa [#allocation6], 1
    %975 = vsyncpa [#allocation9], 1
    %976 = vsyncpa [#allocation4], 1
    %s977 = scalar_lea.sflag [#allocation4], 1
    %978 = vsyncpa %s977, 1

</llo_original>
